<compile_context>
chip_gen: v5e
topology: v5e:2x2
jax: 0.10.0
libtpu: 0.0.40
codegen_flags: <defaults>
</compile_context>

<pallas_src>
import jax
import jax.numpy as jnp
from jax import lax
from jax.experimental import pallas as pl
from jax.experimental.pallas import tpu as pltpu


def _decoder_block_kernel(x_ref, w1_ref, b1_ref, w2_ref, b2_ref, o_ref,
                          xpad_ref, midp_ref):
    """One batch image per grid step.

    x_ref : (1, H, W, Cin)        input image (NHWC)
    w1_ref: (3, 3, Cin, Cmid)     conv weight, b1_ref: (1, Cmid)
    w2_ref: (4, 4, Cmid, Cout)    deconv weight (per-tap (Cmid, Cout)), b2_ref: (1, Cout)
    o_ref : (1, 2, 2, H, W, Cout) phase-blocked output:
            o[0, ph, pw, i, j, :] == y[2*i+ph, 2*j+pw, :]
    xpad_ref: VMEM (H+2, W+2, Cin)  zero-padded input scratch
    midp_ref: VMEM (H+2, W+2, Cmid) zero-padded conv1+ReLU output scratch
    """
    H = x_ref.shape[1]
    W = x_ref.shape[2]
    Cmid = w1_ref.shape[3]
    Cout = w2_ref.shape[3]

    # ---- in-kernel zero padding (no wrapper-side jnp.pad HBM pass) ----
    xpad_ref[...] = jnp.zeros(xpad_ref.shape, xpad_ref.dtype)
    midp_ref[...] = jnp.zeros(midp_ref.shape, midp_ref.dtype)
    xpad_ref[1:H + 1, 1:W + 1, :] = x_ref[0].astype(xpad_ref.dtype)

    # Hoisted bias broadcasts (loop-invariant; JAX does not CSE broadcasts).
    b1_row = jnp.broadcast_to(b1_ref[...].astype(jnp.float32), (W, Cmid))
    b2_row = jnp.broadcast_to(b2_ref[...].astype(jnp.float32), (W, Cout))

    # ---- stage 1: 3x3 conv (pad 1) + bias + ReLU -> midp interior ----
    def conv_row(h, carry):
        acc = b1_row
        for kh in range(3):
            for kw in range(3):
                patch = xpad_ref[h + kh, pl.ds(kw, W), :].astype(jnp.float32)
                w_tap = w1_ref[kh, kw].astype(jnp.float32)          # (Cin, Cmid)
                acc = acc + jnp.dot(patch, w_tap,
                                    preferred_element_type=jnp.float32)
        midp_ref[h + 1, pl.ds(1, W), :] = jnp.maximum(acc, 0.0)
        return carry

    lax.fori_loop(0, H, conv_row, 0)

    # ---- stage 2: ConvTranspose2d(k=4, s=2, p=1) + bias + ReLU ----------
    # Output row oh = 2*i + ph gets contributions from kh with parity
    # kh == (ph + 1) mod 2, reading padded mid row  i + (ph + 3 - kh)//2 ;
    # columns analogously with kw / pw.  Each of the 4 phases is a 2x2 conv.
    def deconv_row(i, carry):
        # 9 distinct shifted patches, shared across the 4 phases.
        patches = [[midp_ref[i + dr, pl.ds(dc, W), :].astype(jnp.float32)
                    for dc in range(3)] for dr in range(3)]
        for ph in range(2):
            for pw in range(2):
                acc = b2_row
                for kh in range(4):
                    if kh % 2 == ph % 2:          # wrong parity -> no contribution
                        continue
                    dr = (ph + 3 - kh) // 2
                    for kw in range(4):
                        if kw % 2 == pw % 2:
                            continue
                        dc = (pw + 3 - kw) // 2
                        w_tap = w2_ref[kh, kw].astype(jnp.float32)  # (Cmid, Cout)
                        acc = acc + jnp.dot(patches[dr][dc], w_tap,
                                            preferred_element_type=jnp.float32)
                o_ref[0, ph, pw, i] = jnp.maximum(acc, 0.0).astype(o_ref.dtype)
        return carry

    lax.fori_loop(0, H, deconv_row, 0)


@jax.jit
def decoder_block_resnet(x_nchw, w1_oihw, b1, w2_iohw, b2):
    """x: (N, Cin, H, W); w1: (Cmid, Cin, 3, 3); b1: (Cmid,);
    w2: (Cmid, Cout, 4, 4) (PyTorch ConvTranspose2d layout); b2: (Cout,).
    Returns (N, Cout, 2H, 2W), matching DecoderBlockResnet.forward."""
    N, Cin, H, W = x_nchw.shape
    Cmid = w1_oihw.shape[0]
    Cout = w2_iohw.shape[1]

    # Layout glue: NCHW -> NHWC, weights to per-tap (Cin, Cout) matrices.
    x_nhwc = jnp.transpose(x_nchw, (0, 2, 3, 1))
    w1 = jnp.transpose(w1_oihw, (2, 3, 1, 0))      # (3, 3, Cin, Cmid)
    w2 = jnp.transpose(w2_iohw, (2, 3, 0, 1))      # (4, 4, Cmid, Cout)
    b1r = b1.reshape(1, Cmid)
    b2r = b2.reshape(1, Cout)

    out_pb = pl.pallas_call(
        _decoder_block_kernel,
        out_shape=jax.ShapeDtypeStruct((N, 2, 2, H, W, Cout), x_nchw.dtype),
        grid_spec=pltpu.PrefetchScalarGridSpec(
            num_scalar_prefetch=0,
            grid=(N,),
            in_specs=[
                pl.BlockSpec((1, H, W, Cin), lambda n: (n, 0, 0, 0)),
                pl.BlockSpec((3, 3, Cin, Cmid), lambda n: (0, 0, 0, 0)),
                pl.BlockSpec((1, Cmid), lambda n: (0, 0)),
                pl.BlockSpec((4, 4, Cmid, Cout), lambda n: (0, 0, 0, 0)),
                pl.BlockSpec((1, Cout), lambda n: (0, 0)),
            ],
            out_specs=pl.BlockSpec((1, 2, 2, H, W, Cout),
                                   lambda n: (n, 0, 0, 0, 0, 0)),
            scratch_shapes=[
                pltpu.VMEM((H + 2, W + 2, Cin), jnp.float32),
                pltpu.VMEM((H + 2, W + 2, Cmid), jnp.float32),
            ],
        ),
        compiler_params=pltpu.CompilerParams(
            dimension_semantics=("parallel",)),
    )(x_nhwc, w1, b1r, w2, b2r)

    # Sub-pixel shuffle: (N, 2, 2, H, W, C) -> (N, 2H, 2W, C) -> NCHW.
    y = out_pb.transpose(0, 3, 1, 4, 2, 5).reshape(N, 2 * H, 2 * W, Cout)
    return jnp.transpose(y, (0, 3, 1, 2))


def _reference(x, w1, b1, w2, b2):
    """Pure-JAX reference matching the PyTorch module."""
    mid = lax.conv_general_dilated(
        x, w1, window_strides=(1, 1), padding=((1, 1), (1, 1)),
        dimension_numbers=("NCHW", "OIHW", "NCHW"),
        precision=lax.Precision.HIGHEST)
    mid = jnp.maximum(mid + b1[None, :, None, None], 0.0)
    # ConvTranspose2d(k=4, s=2, p=1) == dilated conv with flipped kernel.
    w2_conv = jnp.transpose(jnp.flip(w2, axis=(2, 3)), (1, 0, 2, 3))
    out = lax.conv_general_dilated(
        mid, w2_conv, window_strides=(1, 1), padding=((2, 2), (2, 2)),
        lhs_dilation=(2, 2),
        dimension_numbers=("NCHW", "OIHW", "NCHW"),
        precision=lax.Precision.HIGHEST)
    return jnp.maximum(out + b2[None, :, None, None], 0.0)


if __name__ == "__main__":
    N, Cin, Cmid, Cout, H, W = 2, 4, 8, 4, 16, 16
    key = jax.random.PRNGKey(0)
    k1, k2, k3, k4, k5 = jax.random.split(key, 5)
    x = jax.random.normal(k1, (N, Cin, H, W), dtype=jnp.float32)
    w1 = jax.random.normal(k2, (Cmid, Cin, 3, 3), dtype=jnp.float32) * 0.2
    b1 = jax.random.normal(k3, (Cmid,), dtype=jnp.float32) * 0.1
    w2 = jax.random.normal(k4, (Cmid, Cout, 4, 4), dtype=jnp.float32) * 0.2
    b2 = jax.random.normal(k5, (Cout,), dtype=jnp.float32) * 0.1

    out = decoder_block_resnet(x, w1, b1, w2, b2)
    jax.block_until_ready(out)
    assert out.shape == (N, Cout, 2 * H, 2 * W), out.shape

    ref = _reference(x, w1, b1, w2, b2)
    max_err = float(jnp.max(jnp.abs(out - ref)))
    assert jnp.allclose(out, ref, rtol=2e-2, atol=2e-2), f"max abs err {max_err}"

    print("KERNEL_OK")
</pallas_src>

<mosaic_0001>
module attributes {stable_mosaic.version = 11 : i64} {
  func.func @_decoder_block_kernel(%arg0: i32, %arg1: memref<1x16x16x4xf32, #tpu.memory_space<vmem>>, %arg2: memref<3x3x4x8xf32, #tpu.memory_space<vmem>>, %arg3: memref<1x8xf32, #tpu.memory_space<vmem>>, %arg4: memref<4x4x8x4xf32, #tpu.memory_space<vmem>>, %arg5: memref<1x4xf32, #tpu.memory_space<vmem>>, %arg6: memref<1x2x2x16x16x4xf32, #tpu.memory_space<vmem>>, %arg7: memref<18x18x4xf32, #tpu.memory_space<vmem>>, %arg8: memref<18x18x8xf32, #tpu.memory_space<vmem>>) attributes {dimension_semantics = [#tpu.dimension_semantics<parallel>], iteration_bounds = array<i64: 2>, scalar_prefetch = 0 : i64, scratch_operands = 2 : i64, tpu.core_type = #tpu.core_type<tc>, window_params = [{transform_indices = @transform_0, window_bounds = array<i64: 1, 16, 16, 4>}, {pipeline_mode = #tpu.pipeline_mode<synchronous>, transform_indices = @transform_1, window_bounds = array<i64: 3, 3, 4, 8>}, {pipeline_mode = #tpu.pipeline_mode<synchronous>, transform_indices = @transform_2, window_bounds = array<i64: 1, 8>}, {pipeline_mode = #tpu.pipeline_mode<synchronous>, transform_indices = @transform_3, window_bounds = array<i64: 4, 4, 8, 4>}, {pipeline_mode = #tpu.pipeline_mode<synchronous>, transform_indices = @transform_4, window_bounds = array<i64: 1, 4>}, {transform_indices = @transform_5, window_bounds = array<i64: 1, 2, 2, 16, 16, 4>}]} {
    %cst = arith.constant 0.000000e+00 : f32
    %0 = vector.broadcast %cst : f32 to vector<18x18x4xf32>
    %c0 = arith.constant 0 : index
    %c0_0 = arith.constant 0 : index
    %c0_1 = arith.constant 0 : index
    %1 = vector.load %arg7[%c0, %c0_0, %c0_1] : memref<18x18x4xf32, #tpu.memory_space<vmem>>, vector<18x18x4xf32>
    tpu.vector_store %arg7[%c0, %c0_0, %c0_1], %0 {strides = array<i32>} : memref<18x18x4xf32, #tpu.memory_space<vmem>>, vector<18x18x4xf32>,
    %cst_2 = arith.constant 0.000000e+00 : f32
    %2 = vector.broadcast %cst_2 : f32 to vector<18x18x8xf32>
    %c0_3 = arith.constant 0 : index
    %c0_4 = arith.constant 0 : index
    %c0_5 = arith.constant 0 : index
    %3 = vector.load %arg8[%c0_3, %c0_4, %c0_5] : memref<18x18x8xf32, #tpu.memory_space<vmem>>, vector<18x18x8xf32>
    tpu.vector_store %arg8[%c0_3, %c0_4, %c0_5], %2 {strides = array<i32>} : memref<18x18x8xf32, #tpu.memory_space<vmem>>, vector<18x18x8xf32>,
    %c0_6 = arith.constant 0 : index
    %c0_7 = arith.constant 0 : index
    %c0_8 = arith.constant 0 : index
    %c0_9 = arith.constant 0 : index
    %4 = vector.load %arg1[%c0_6, %c0_7, %c0_8, %c0_9] : memref<1x16x16x4xf32, #tpu.memory_space<vmem>>, vector<1x16x16x4xf32>
    %5 = vector.shape_cast %4 : vector<1x16x16x4xf32> to vector<16x16x4xf32>
    %c1 = arith.constant 1 : index
    %c1_10 = arith.constant 1 : index
    %c0_11 = arith.constant 0 : index
    %6 = vector.load %arg7[%c1, %c1_10, %c0_11] : memref<18x18x4xf32, #tpu.memory_space<vmem>>, vector<16x16x4xf32>
    tpu.vector_store %arg7[%c1, %c1_10, %c0_11], %5 {strides = array<i32>} : memref<18x18x4xf32, #tpu.memory_space<vmem>>, vector<16x16x4xf32>,
    %c0_12 = arith.constant 0 : index
    %c0_13 = arith.constant 0 : index
    %7 = vector.load %arg3[%c0_12, %c0_13] : memref<1x8xf32, #tpu.memory_space<vmem>>, vector<1x8xf32>
    %8 = vector.shape_cast %7 : vector<1x8xf32> to vector<1x8xf32>
    %9 = vector.broadcast %8 : vector<1x8xf32> to vector<16x8xf32>
    %c0_14 = arith.constant 0 : index
    %c0_15 = arith.constant 0 : index
    %10 = vector.load %arg5[%c0_14, %c0_15] : memref<1x4xf32, #tpu.memory_space<vmem>>, vector<1x4xf32>
    %11 = vector.shape_cast %10 : vector<1x4xf32> to vector<1x4xf32>
    %12 = vector.broadcast %11 : vector<1x4xf32> to vector<16x4xf32>
    %c0_i32 = arith.constant 0 : i32
    %c16_i32 = arith.constant 16 : i32
    %13 = arith.addi %c0_i32, %c16_i32 : i32
    %c1_i32 = arith.constant 1 : i32
    scf.for %arg9 = %c0_i32 to %13 step %c1_i32  : i32 {
      %c0_i32_21 = arith.constant 0 : i32
      %15 = arith.addi %arg9, %c0_i32_21 : i32
      %16 = arith.index_cast %15 : i32 to index
      %c0_22 = arith.constant 0 : index
      %c0_23 = arith.constant 0 : index
      %17 = vector.load %arg7[%16, %c0_22, %c0_23] : memref<18x18x4xf32, #tpu.memory_space<vmem>>, vector<1x16x4xf32>
      %18 = vector.shape_cast %17 : vector<1x16x4xf32> to vector<16x4xf32>
      %c0_24 = arith.constant 0 : index
      %c0_25 = arith.constant 0 : index
      %c0_26 = arith.constant 0 : index
      %c0_27 = arith.constant 0 : index
      %19 = vector.load %arg2[%c0_24, %c0_25, %c0_26, %c0_27] : memref<3x3x4x8xf32, #tpu.memory_space<vmem>>, vector<1x1x4x8xf32>
      %20 = vector.shape_cast %19 : vector<1x1x4x8xf32> to vector<4x8xf32>
      %cst_28 = arith.constant dense<0.000000e+00> : vector<16x8xf32>
      %21 = tpu.matmul %18, %20, %cst_28 {dimension_numbers = #tpu.dot_dimension_numbers<[1], [0], [0], [1], [0, 0, 1, 1], [], []>} : vector<16x4xf32>, vector<4x8xf32>, vector<16x8xf32> -> vector<16x8xf32>
      %22 = arith.addf %9, %21 : vector<16x8xf32>
      %c0_i32_29 = arith.constant 0 : i32
      %23 = arith.addi %arg9, %c0_i32_29 : i32
      %24 = arith.index_cast %23 : i32 to index
      %c1_30 = arith.constant 1 : index
      %c0_31 = arith.constant 0 : index
      %25 = vector.load %arg7[%24, %c1_30, %c0_31] : memref<18x18x4xf32, #tpu.memory_space<vmem>>, vector<1x16x4xf32>
      %26 = vector.shape_cast %25 : vector<1x16x4xf32> to vector<16x4xf32>
      %c0_32 = arith.constant 0 : index
      %c1_33 = arith.constant 1 : index
      %c0_34 = arith.constant 0 : index
      %c0_35 = arith.constant 0 : index
      %27 = vector.load %arg2[%c0_32, %c1_33, %c0_34, %c0_35] : memref<3x3x4x8xf32, #tpu.memory_space<vmem>>, vector<1x1x4x8xf32>
      %28 = vector.shape_cast %27 : vector<1x1x4x8xf32> to vector<4x8xf32>
      %cst_36 = arith.constant dense<0.000000e+00> : vector<16x8xf32>
      %29 = tpu.matmul %26, %28, %cst_36 {dimension_numbers = #tpu.dot_dimension_numbers<[1], [0], [0], [1], [0, 0, 1, 1], [], []>} : vector<16x4xf32>, vector<4x8xf32>, vector<16x8xf32> -> vector<16x8xf32>
      %30 = arith.addf %22, %29 : vector<16x8xf32>
      %c0_i32_37 = arith.constant 0 : i32
      %31 = arith.addi %arg9, %c0_i32_37 : i32
      %32 = arith.index_cast %31 : i32 to index
      %c2 = arith.constant 2 : index
      %c0_38 = arith.constant 0 : index
      %33 = vector.load %arg7[%32, %c2, %c0_38] : memref<18x18x4xf32, #tpu.memory_space<vmem>>, vector<1x16x4xf32>
      %34 = vector.shape_cast %33 : vector<1x16x4xf32> to vector<16x4xf32>
      %c0_39 = arith.constant 0 : index
      %c2_40 = arith.constant 2 : index
      %c0_41 = arith.constant 0 : index
      %c0_42 = arith.constant 0 : index
      %35 = vector.load %arg2[%c0_39, %c2_40, %c0_41, %c0_42] : memref<3x3x4x8xf32, #tpu.memory_space<vmem>>, vector<1x1x4x8xf32>
      %36 = vector.shape_cast %35 : vector<1x1x4x8xf32> to vector<4x8xf32>
      %cst_43 = arith.constant dense<0.000000e+00> : vector<16x8xf32>
      %37 = tpu.matmul %34, %36, %cst_43 {dimension_numbers = #tpu.dot_dimension_numbers<[1], [0], [0], [1], [0, 0, 1, 1], [], []>} : vector<16x4xf32>, vector<4x8xf32>, vector<16x8xf32> -> vector<16x8xf32>
      %38 = arith.addf %30, %37 : vector<16x8xf32>
      %c1_i32_44 = arith.constant 1 : i32
      %39 = arith.addi %arg9, %c1_i32_44 : i32
      %40 = arith.index_cast %39 : i32 to index
      %c0_45 = arith.constant 0 : index
      %c0_46 = arith.constant 0 : index
      %41 = vector.load %arg7[%40, %c0_45, %c0_46] : memref<18x18x4xf32, #tpu.memory_space<vmem>>, vector<1x16x4xf32>
      %42 = vector.shape_cast %41 : vector<1x16x4xf32> to vector<16x4xf32>
      %c1_47 = arith.constant 1 : index
      %c0_48 = arith.constant 0 : index
      %c0_49 = arith.constant 0 : index
      %c0_50 = arith.constant 0 : index
      %43 = vector.load %arg2[%c1_47, %c0_48, %c0_49, %c0_50] : memref<3x3x4x8xf32, #tpu.memory_space<vmem>>, vector<1x1x4x8xf32>
      %44 = vector.shape_cast %43 : vector<1x1x4x8xf32> to vector<4x8xf32>
      %cst_51 = arith.constant dense<0.000000e+00> : vector<16x8xf32>
      %45 = tpu.matmul %42, %44, %cst_51 {dimension_numbers = #tpu.dot_dimension_numbers<[1], [0], [0], [1], [0, 0, 1, 1], [], []>} : vector<16x4xf32>, vector<4x8xf32>, vector<16x8xf32> -> vector<16x8xf32>
      %46 = arith.addf %38, %45 : vector<16x8xf32>
      %c1_i32_52 = arith.constant 1 : i32
      %47 = arith.addi %arg9, %c1_i32_52 : i32
      %48 = arith.index_cast %47 : i32 to index
      %c1_53 = arith.constant 1 : index
      %c0_54 = arith.constant 0 : index
      %49 = vector.load %arg7[%48, %c1_53, %c0_54] : memref<18x18x4xf32, #tpu.memory_space<vmem>>, vector<1x16x4xf32>
      %50 = vector.shape_cast %49 : vector<1x16x4xf32> to vector<16x4xf32>
      %c1_55 = arith.constant 1 : index
      %c1_56 = arith.constant 1 : index
      %c0_57 = arith.constant 0 : index
      %c0_58 = arith.constant 0 : index
      %51 = vector.load %arg2[%c1_55, %c1_56, %c0_57, %c0_58] : memref<3x3x4x8xf32, #tpu.memory_space<vmem>>, vector<1x1x4x8xf32>
      %52 = vector.shape_cast %51 : vector<1x1x4x8xf32> to vector<4x8xf32>
      %cst_59 = arith.constant dense<0.000000e+00> : vector<16x8xf32>
      %53 = tpu.matmul %50, %52, %cst_59 {dimension_numbers = #tpu.dot_dimension_numbers<[1], [0], [0], [1], [0, 0, 1, 1], [], []>} : vector<16x4xf32>, vector<4x8xf32>, vector<16x8xf32> -> vector<16x8xf32>
      %54 = arith.addf %46, %53 : vector<16x8xf32>
      %c1_i32_60 = arith.constant 1 : i32
      %55 = arith.addi %arg9, %c1_i32_60 : i32
      %56 = arith.index_cast %55 : i32 to index
      %c2_61 = arith.constant 2 : index
      %c0_62 = arith.constant 0 : index
      %57 = vector.load %arg7[%56, %c2_61, %c0_62] : memref<18x18x4xf32, #tpu.memory_space<vmem>>, vector<1x16x4xf32>
      %58 = vector.shape_cast %57 : vector<1x16x4xf32> to vector<16x4xf32>
      %c1_63 = arith.constant 1 : index
      %c2_64 = arith.constant 2 : index
      %c0_65 = arith.constant 0 : index
      %c0_66 = arith.constant 0 : index
      %59 = vector.load %arg2[%c1_63, %c2_64, %c0_65, %c0_66] : memref<3x3x4x8xf32, #tpu.memory_space<vmem>>, vector<1x1x4x8xf32>
      %60 = vector.shape_cast %59 : vector<1x1x4x8xf32> to vector<4x8xf32>
      %cst_67 = arith.constant dense<0.000000e+00> : vector<16x8xf32>
      %61 = tpu.matmul %58, %60, %cst_67 {dimension_numbers = #tpu.dot_dimension_numbers<[1], [0], [0], [1], [0, 0, 1, 1], [], []>} : vector<16x4xf32>, vector<4x8xf32>, vector<16x8xf32> -> vector<16x8xf32>
      %62 = arith.addf %54, %61 : vector<16x8xf32>
      %c2_i32 = arith.constant 2 : i32
      %63 = arith.addi %arg9, %c2_i32 : i32
      %64 = arith.index_cast %63 : i32 to index
      %c0_68 = arith.constant 0 : index
      %c0_69 = arith.constant 0 : index
      %65 = vector.load %arg7[%64, %c0_68, %c0_69] : memref<18x18x4xf32, #tpu.memory_space<vmem>>, vector<1x16x4xf32>
      %66 = vector.shape_cast %65 : vector<1x16x4xf32> to vector<16x4xf32>
      %c2_70 = arith.constant 2 : index
      %c0_71 = arith.constant 0 : index
      %c0_72 = arith.constant 0 : index
      %c0_73 = arith.constant 0 : index
      %67 = vector.load %arg2[%c2_70, %c0_71, %c0_72, %c0_73] : memref<3x3x4x8xf32, #tpu.memory_space<vmem>>, vector<1x1x4x8xf32>
      %68 = vector.shape_cast %67 : vector<1x1x4x8xf32> to vector<4x8xf32>
      %cst_74 = arith.constant dense<0.000000e+00> : vector<16x8xf32>
      %69 = tpu.matmul %66, %68, %cst_74 {dimension_numbers = #tpu.dot_dimension_numbers<[1], [0], [0], [1], [0, 0, 1, 1], [], []>} : vector<16x4xf32>, vector<4x8xf32>, vector<16x8xf32> -> vector<16x8xf32>
      %70 = arith.addf %62, %69 : vector<16x8xf32>
      %c2_i32_75 = arith.constant 2 : i32
      %71 = arith.addi %arg9, %c2_i32_75 : i32
      %72 = arith.index_cast %71 : i32 to index
      %c1_76 = arith.constant 1 : index
      %c0_77 = arith.constant 0 : index
      %73 = vector.load %arg7[%72, %c1_76, %c0_77] : memref<18x18x4xf32, #tpu.memory_space<vmem>>, vector<1x16x4xf32>
      %74 = vector.shape_cast %73 : vector<1x16x4xf32> to vector<16x4xf32>
      %c2_78 = arith.constant 2 : index
      %c1_79 = arith.constant 1 : index
      %c0_80 = arith.constant 0 : index
      %c0_81 = arith.constant 0 : index
      %75 = vector.load %arg2[%c2_78, %c1_79, %c0_80, %c0_81] : memref<3x3x4x8xf32, #tpu.memory_space<vmem>>, vector<1x1x4x8xf32>
      %76 = vector.shape_cast %75 : vector<1x1x4x8xf32> to vector<4x8xf32>
      %cst_82 = arith.constant dense<0.000000e+00> : vector<16x8xf32>
      %77 = tpu.matmul %74, %76, %cst_82 {dimension_numbers = #tpu.dot_dimension_numbers<[1], [0], [0], [1], [0, 0, 1, 1], [], []>} : vector<16x4xf32>, vector<4x8xf32>, vector<16x8xf32> -> vector<16x8xf32>
      %78 = arith.addf %70, %77 : vector<16x8xf32>
      %c2_i32_83 = arith.constant 2 : i32
      %79 = arith.addi %arg9, %c2_i32_83 : i32
      %80 = arith.index_cast %79 : i32 to index
      %c2_84 = arith.constant 2 : index
      %c0_85 = arith.constant 0 : index
      %81 = vector.load %arg7[%80, %c2_84, %c0_85] : memref<18x18x4xf32, #tpu.memory_space<vmem>>, vector<1x16x4xf32>
      %82 = vector.shape_cast %81 : vector<1x16x4xf32> to vector<16x4xf32>
      %c2_86 = arith.constant 2 : index
      %c2_87 = arith.constant 2 : index
      %c0_88 = arith.constant 0 : index
      %c0_89 = arith.constant 0 : index
      %83 = vector.load %arg2[%c2_86, %c2_87, %c0_88, %c0_89] : memref<3x3x4x8xf32, #tpu.memory_space<vmem>>, vector<1x1x4x8xf32>
      %84 = vector.shape_cast %83 : vector<1x1x4x8xf32> to vector<4x8xf32>
      %cst_90 = arith.constant dense<0.000000e+00> : vector<16x8xf32>
      %85 = tpu.matmul %82, %84, %cst_90 {dimension_numbers = #tpu.dot_dimension_numbers<[1], [0], [0], [1], [0, 0, 1, 1], [], []>} : vector<16x4xf32>, vector<4x8xf32>, vector<16x8xf32> -> vector<16x8xf32>
      %86 = arith.addf %78, %85 : vector<16x8xf32>
      %cst_91 = arith.constant 0.000000e+00 : f32
      %87 = vector.broadcast %cst_91 : f32 to vector<16x8xf32>
      %88 = arith.maximumf %86, %87 : vector<16x8xf32>
      %c1_i32_92 = arith.constant 1 : i32
      %89 = arith.addi %arg9, %c1_i32_92 : i32
      %90 = arith.index_cast %89 : i32 to index
      %c1_93 = arith.constant 1 : index
      %c0_94 = arith.constant 0 : index
      %91 = vector.load %arg8[%90, %c1_93, %c0_94] : memref<18x18x8xf32, #tpu.memory_space<vmem>>, vector<1x16x8xf32>
      %92 = vector.shape_cast %91 : vector<1x16x8xf32> to vector<16x8xf32>
      %93 = vector.shape_cast %88 : vector<16x8xf32> to vector<1x16x8xf32>
      tpu.vector_store %arg8[%90, %c1_93, %c0_94], %93 {strides = array<i32>} : memref<18x18x8xf32, #tpu.memory_space<vmem>>, vector<1x16x8xf32>,
    }
    %c16_i32_16 = arith.constant 16 : i32
    %c0_i32_17 = arith.constant 0 : i32
    %c16_i32_18 = arith.constant 16 : i32
    %14 = arith.addi %c0_i32_17, %c16_i32_18 : i32
    %c1_i32_19 = arith.constant 1 : i32
    scf.for %arg9 = %c0_i32_17 to %14 step %c1_i32_19  : i32 {
      %c0_i32_21 = arith.constant 0 : i32
      %15 = arith.addi %arg9, %c0_i32_21 : i32
      %16 = arith.index_cast %15 : i32 to index
      %c0_22 = arith.constant 0 : index
      %c0_23 = arith.constant 0 : index
      %17 = vector.load %arg8[%16, %c0_22, %c0_23] : memref<18x18x8xf32, #tpu.memory_space<vmem>>, vector<1x16x8xf32>
      %18 = vector.shape_cast %17 : vector<1x16x8xf32> to vector<16x8xf32>
      %c0_i32_24 = arith.constant 0 : i32
      %19 = arith.addi %arg9, %c0_i32_24 : i32
      %20 = arith.index_cast %19 : i32 to index
      %c1_25 = arith.constant 1 : index
      %c0_26 = arith.constant 0 : index
      %21 = vector.load %arg8[%20, %c1_25, %c0_26] : memref<18x18x8xf32, #tpu.memory_space<vmem>>, vector<1x16x8xf32>
      %22 = vector.shape_cast %21 : vector<1x16x8xf32> to vector<16x8xf32>
      %c0_i32_27 = arith.constant 0 : i32
      %23 = arith.addi %arg9, %c0_i32_27 : i32
      %24 = arith.index_cast %23 : i32 to index
      %c2 = arith.constant 2 : index
      %c0_28 = arith.constant 0 : index
      %25 = vector.load %arg8[%24, %c2, %c0_28] : memref<18x18x8xf32, #tpu.memory_space<vmem>>, vector<1x16x8xf32>
      %26 = vector.shape_cast %25 : vector<1x16x8xf32> to vector<16x8xf32>
      %c1_i32_29 = arith.constant 1 : i32
      %27 = arith.addi %arg9, %c1_i32_29 : i32
      %28 = arith.index_cast %27 : i32 to index
      %c0_30 = arith.constant 0 : index
      %c0_31 = arith.constant 0 : index
      %29 = vector.load %arg8[%28, %c0_30, %c0_31] : memref<18x18x8xf32, #tpu.memory_space<vmem>>, vector<1x16x8xf32>
      %30 = vector.shape_cast %29 : vector<1x16x8xf32> to vector<16x8xf32>
      %c1_i32_32 = arith.constant 1 : i32
      %31 = arith.addi %arg9, %c1_i32_32 : i32
      %32 = arith.index_cast %31 : i32 to index
      %c1_33 = arith.constant 1 : index
      %c0_34 = arith.constant 0 : index
      %33 = vector.load %arg8[%32, %c1_33, %c0_34] : memref<18x18x8xf32, #tpu.memory_space<vmem>>, vector<1x16x8xf32>
      %34 = vector.shape_cast %33 : vector<1x16x8xf32> to vector<16x8xf32>
      %c1_i32_35 = arith.constant 1 : i32
      %35 = arith.addi %arg9, %c1_i32_35 : i32
      %36 = arith.index_cast %35 : i32 to index
      %c2_36 = arith.constant 2 : index
      %c0_37 = arith.constant 0 : index
      %37 = vector.load %arg8[%36, %c2_36, %c0_37] : memref<18x18x8xf32, #tpu.memory_space<vmem>>, vector<1x16x8xf32>
      %38 = vector.shape_cast %37 : vector<1x16x8xf32> to vector<16x8xf32>
      %c2_i32 = arith.constant 2 : i32
      %39 = arith.addi %arg9, %c2_i32 : i32
      %40 = arith.index_cast %39 : i32 to index
      %c0_38 = arith.constant 0 : index
      %c0_39 = arith.constant 0 : index
      %41 = vector.load %arg8[%40, %c0_38, %c0_39] : memref<18x18x8xf32, #tpu.memory_space<vmem>>, vector<1x16x8xf32>
      %42 = vector.shape_cast %41 : vector<1x16x8xf32> to vector<16x8xf32>
      %c2_i32_40 = arith.constant 2 : i32
      %43 = arith.addi %arg9, %c2_i32_40 : i32
      %44 = arith.index_cast %43 : i32 to index
      %c1_41 = arith.constant 1 : index
      %c0_42 = arith.constant 0 : index
      %45 = vector.load %arg8[%44, %c1_41, %c0_42] : memref<18x18x8xf32, #tpu.memory_space<vmem>>, vector<1x16x8xf32>
      %46 = vector.shape_cast %45 : vector<1x16x8xf32> to vector<16x8xf32>
      %c2_i32_43 = arith.constant 2 : i32
      %47 = arith.addi %arg9, %c2_i32_43 : i32
      %48 = arith.index_cast %47 : i32 to index
      %c2_44 = arith.constant 2 : index
      %c0_45 = arith.constant 0 : index
      %49 = vector.load %arg8[%48, %c2_44, %c0_45] : memref<18x18x8xf32, #tpu.memory_space<vmem>>, vector<1x16x8xf32>
      %50 = vector.shape_cast %49 : vector<1x16x8xf32> to vector<16x8xf32>
      %c1_46 = arith.constant 1 : index
      %c1_47 = arith.constant 1 : index
      %c0_48 = arith.constant 0 : index
      %c0_49 = arith.constant 0 : index
      %51 = vector.load %arg4[%c1_46, %c1_47, %c0_48, %c0_49] : memref<4x4x8x4xf32, #tpu.memory_space<vmem>>, vector<1x1x8x4xf32>
      %52 = vector.shape_cast %51 : vector<1x1x8x4xf32> to vector<8x4xf32>
      %cst_50 = arith.constant dense<0.000000e+00> : vector<16x4xf32>
      %53 = tpu.matmul %34, %52, %cst_50 {dimension_numbers = #tpu.dot_dimension_numbers<[1], [0], [0], [1], [0, 0, 1, 1], [], []>} : vector<16x8xf32>, vector<8x4xf32>, vector<16x4xf32> -> vector<16x4xf32>
      %54 = arith.addf %12, %53 : vector<16x4xf32>
      %c1_51 = arith.constant 1 : index
      %c3 = arith.constant 3 : index
      %c0_52 = arith.constant 0 : index
      %c0_53 = arith.constant 0 : index
      %55 = vector.load %arg4[%c1_51, %c3, %c0_52, %c0_53] : memref<4x4x8x4xf32, #tpu.memory_space<vmem>>, vector<1x1x8x4xf32>
      %56 = vector.shape_cast %55 : vector<1x1x8x4xf32> to vector<8x4xf32>
      %cst_54 = arith.constant dense<0.000000e+00> : vector<16x4xf32>
      %57 = tpu.matmul %30, %56, %cst_54 {dimension_numbers = #tpu.dot_dimension_numbers<[1], [0], [0], [1], [0, 0, 1, 1], [], []>} : vector<16x8xf32>, vector<8x4xf32>, vector<16x4xf32> -> vector<16x4xf32>
      %58 = arith.addf %54, %57 : vector<16x4xf32>
      %c3_55 = arith.constant 3 : index
      %c1_56 = arith.constant 1 : index
      %c0_57 = arith.constant 0 : index
      %c0_58 = arith.constant 0 : index
      %59 = vector.load %arg4[%c3_55, %c1_56, %c0_57, %c0_58] : memref<4x4x8x4xf32, #tpu.memory_space<vmem>>, vector<1x1x8x4xf32>
      %60 = vector.shape_cast %59 : vector<1x1x8x4xf32> to vector<8x4xf32>
      %cst_59 = arith.constant dense<0.000000e+00> : vector<16x4xf32>
      %61 = tpu.matmul %22, %60, %cst_59 {dimension_numbers = #tpu.dot_dimension_numbers<[1], [0], [0], [1], [0, 0, 1, 1], [], []>} : vector<16x8xf32>, vector<8x4xf32>, vector<16x4xf32> -> vector<16x4xf32>
      %62 = arith.addf %58, %61 : vector<16x4xf32>
      %c3_60 = arith.constant 3 : index
      %c3_61 = arith.constant 3 : index
      %c0_62 = arith.constant 0 : index
      %c0_63 = arith.constant 0 : index
      %63 = vector.load %arg4[%c3_60, %c3_61, %c0_62, %c0_63] : memref<4x4x8x4xf32, #tpu.memory_space<vmem>>, vector<1x1x8x4xf32>
      %64 = vector.shape_cast %63 : vector<1x1x8x4xf32> to vector<8x4xf32>
      %cst_64 = arith.constant dense<0.000000e+00> : vector<16x4xf32>
      %65 = tpu.matmul %18, %64, %cst_64 {dimension_numbers = #tpu.dot_dimension_numbers<[1], [0], [0], [1], [0, 0, 1, 1], [], []>} : vector<16x8xf32>, vector<8x4xf32>, vector<16x4xf32> -> vector<16x4xf32>
      %66 = arith.addf %62, %65 : vector<16x4xf32>
      %cst_65 = arith.constant 0.000000e+00 : f32
      %67 = vector.broadcast %cst_65 : f32 to vector<16x4xf32>
      %68 = arith.maximumf %66, %67 : vector<16x4xf32>
      %c0_66 = arith.constant 0 : index
      %c0_67 = arith.constant 0 : index
      %c0_68 = arith.constant 0 : index
      %69 = arith.index_cast %arg9 : i32 to index
      %c0_69 = arith.constant 0 : index
      %c0_70 = arith.constant 0 : index
      %70 = vector.load %arg6[%c0_66, %c0_67, %c0_68, %69, %c0_69, %c0_70] : memref<1x2x2x16x16x4xf32, #tpu.memory_space<vmem>>, vector<1x1x1x1x16x4xf32>
      %71 = vector.shape_cast %70 : vector<1x1x1x1x16x4xf32> to vector<16x4xf32>
      %72 = vector.shape_cast %68 : vector<16x4xf32> to vector<1x1x1x1x16x4xf32>
      tpu.vector_store %arg6[%c0_66, %c0_67, %c0_68, %69, %c0_69, %c0_70], %72 {strides = array<i32>} : memref<1x2x2x16x16x4xf32, #tpu.memory_space<vmem>>, vector<1x1x1x1x16x4xf32>,
      %c1_71 = arith.constant 1 : index
      %c0_72 = arith.constant 0 : index
      %c0_73 = arith.constant 0 : index
      %c0_74 = arith.constant 0 : index
      %73 = vector.load %arg4[%c1_71, %c0_72, %c0_73, %c0_74] : memref<4x4x8x4xf32, #tpu.memory_space<vmem>>, vector<1x1x8x4xf32>
      %74 = vector.shape_cast %73 : vector<1x1x8x4xf32> to vector<8x4xf32>
      %cst_75 = arith.constant dense<0.000000e+00> : vector<16x4xf32>
      %75 = tpu.matmul %38, %74, %cst_75 {dimension_numbers = #tpu.dot_dimension_numbers<[1], [0], [0], [1], [0, 0, 1, 1], [], []>} : vector<16x8xf32>, vector<8x4xf32>, vector<16x4xf32> -> vector<16x4xf32>
      %76 = arith.addf %12, %75 : vector<16x4xf32>
      %c1_76 = arith.constant 1 : index
      %c2_77 = arith.constant 2 : index
      %c0_78 = arith.constant 0 : index
      %c0_79 = arith.constant 0 : index
      %77 = vector.load %arg4[%c1_76, %c2_77, %c0_78, %c0_79] : memref<4x4x8x4xf32, #tpu.memory_space<vmem>>, vector<1x1x8x4xf32>
      %78 = vector.shape_cast %77 : vector<1x1x8x4xf32> to vector<8x4xf32>
      %cst_80 = arith.constant dense<0.000000e+00> : vector<16x4xf32>
      %79 = tpu.matmul %34, %78, %cst_80 {dimension_numbers = #tpu.dot_dimension_numbers<[1], [0], [0], [1], [0, 0, 1, 1], [], []>} : vector<16x8xf32>, vector<8x4xf32>, vector<16x4xf32> -> vector<16x4xf32>
      %80 = arith.addf %76, %79 : vector<16x4xf32>
      %c3_81 = arith.constant 3 : index
      %c0_82 = arith.constant 0 : index
      %c0_83 = arith.constant 0 : index
      %c0_84 = arith.constant 0 : index
      %81 = vector.load %arg4[%c3_81, %c0_82, %c0_83, %c0_84] : memref<4x4x8x4xf32, #tpu.memory_space<vmem>>, vector<1x1x8x4xf32>
      %82 = vector.shape_cast %81 : vector<1x1x8x4xf32> to vector<8x4xf32>
      %cst_85 = arith.constant dense<0.000000e+00> : vector<16x4xf32>
      %83 = tpu.matmul %26, %82, %cst_85 {dimension_numbers = #tpu.dot_dimension_numbers<[1], [0], [0], [1], [0, 0, 1, 1], [], []>} : vector<16x8xf32>, vector<8x4xf32>, vector<16x4xf32> -> vector<16x4xf32>
      %84 = arith.addf %80, %83 : vector<16x4xf32>
      %c3_86 = arith.constant 3 : index
      %c2_87 = arith.constant 2 : index
      %c0_88 = arith.constant 0 : index
      %c0_89 = arith.constant 0 : index
      %85 = vector.load %arg4[%c3_86, %c2_87, %c0_88, %c0_89] : memref<4x4x8x4xf32, #tpu.memory_space<vmem>>, vector<1x1x8x4xf32>
      %86 = vector.shape_cast %85 : vector<1x1x8x4xf32> to vector<8x4xf32>
      %cst_90 = arith.constant dense<0.000000e+00> : vector<16x4xf32>
      %87 = tpu.matmul %22, %86, %cst_90 {dimension_numbers = #tpu.dot_dimension_numbers<[1], [0], [0], [1], [0, 0, 1, 1], [], []>} : vector<16x8xf32>, vector<8x4xf32>, vector<16x4xf32> -> vector<16x4xf32>
      %88 = arith.addf %84, %87 : vector<16x4xf32>
      %cst_91 = arith.constant 0.000000e+00 : f32
      %89 = vector.broadcast %cst_91 : f32 to vector<16x4xf32>
      %90 = arith.maximumf %88, %89 : vector<16x4xf32>
      %c0_92 = arith.constant 0 : index
      %c0_93 = arith.constant 0 : index
      %c1_94 = arith.constant 1 : index
      %91 = arith.index_cast %arg9 : i32 to index
      %c0_95 = arith.constant 0 : index
      %c0_96 = arith.constant 0 : index
      %92 = vector.load %arg6[%c0_92, %c0_93, %c1_94, %91, %c0_95, %c0_96] : memref<1x2x2x16x16x4xf32, #tpu.memory_space<vmem>>, vector<1x1x1x1x16x4xf32>
      %93 = vector.shape_cast %92 : vector<1x1x1x1x16x4xf32> to vector<16x4xf32>
      %94 = vector.shape_cast %90 : vector<16x4xf32> to vector<1x1x1x1x16x4xf32>
      tpu.vector_store %arg6[%c0_92, %c0_93, %c1_94, %91, %c0_95, %c0_96], %94 {strides = array<i32>} : memref<1x2x2x16x16x4xf32, #tpu.memory_space<vmem>>, vector<1x1x1x1x16x4xf32>,
      %c0_97 = arith.constant 0 : index
      %c1_98 = arith.constant 1 : index
      %c0_99 = arith.constant 0 : index
      %c0_100 = arith.constant 0 : index
      %95 = vector.load %arg4[%c0_97, %c1_98, %c0_99, %c0_100] : memref<4x4x8x4xf32, #tpu.memory_space<vmem>>, vector<1x1x8x4xf32>
      %96 = vector.shape_cast %95 : vector<1x1x8x4xf32> to vector<8x4xf32>
      %cst_101 = arith.constant dense<0.000000e+00> : vector<16x4xf32>
      %97 = tpu.matmul %46, %96, %cst_101 {dimension_numbers = #tpu.dot_dimension_numbers<[1], [0], [0], [1], [0, 0, 1, 1], [], []>} : vector<16x8xf32>, vector<8x4xf32>, vector<16x4xf32> -> vector<16x4xf32>
      %98 = arith.addf %12, %97 : vector<16x4xf32>
      %c0_102 = arith.constant 0 : index
      %c3_103 = arith.constant 3 : index
      %c0_104 = arith.constant 0 : index
      %c0_105 = arith.constant 0 : index
      %99 = vector.load %arg4[%c0_102, %c3_103, %c0_104, %c0_105] : memref<4x4x8x4xf32, #tpu.memory_space<vmem>>, vector<1x1x8x4xf32>
      %100 = vector.shape_cast %99 : vector<1x1x8x4xf32> to vector<8x4xf32>
      %cst_106 = arith.constant dense<0.000000e+00> : vector<16x4xf32>
      %101 = tpu.matmul %42, %100, %cst_106 {dimension_numbers = #tpu.dot_dimension_numbers<[1], [0], [0], [1], [0, 0, 1, 1], [], []>} : vector<16x8xf32>, vector<8x4xf32>, vector<16x4xf32> -> vector<16x4xf32>
      %102 = arith.addf %98, %101 : vector<16x4xf32>
      %c2_107 = arith.constant 2 : index
      %c1_108 = arith.constant 1 : index
      %c0_109 = arith.constant 0 : index
      %c0_110 = arith.constant 0 : index
      %103 = vector.load %arg4[%c2_107, %c1_108, %c0_109, %c0_110] : memref<4x4x8x4xf32, #tpu.memory_space<vmem>>, vector<1x1x8x4xf32>
      %104 = vector.shape_cast %103 : vector<1x1x8x4xf32> to vector<8x4xf32>
      %cst_111 = arith.constant dense<0.000000e+00> : vector<16x4xf32>
      %105 = tpu.matmul %34, %104, %cst_111 {dimension_numbers = #tpu.dot_dimension_numbers<[1], [0], [0], [1], [0, 0, 1, 1], [], []>} : vector<16x8xf32>, vector<8x4xf32>, vector<16x4xf32> -> vector<16x4xf32>
      %106 = arith.addf %102, %105 : vector<16x4xf32>
      %c2_112 = arith.constant 2 : index
      %c3_113 = arith.constant 3 : index
      %c0_114 = arith.constant 0 : index
      %c0_115 = arith.constant 0 : index
      %107 = vector.load %arg4[%c2_112, %c3_113, %c0_114, %c0_115] : memref<4x4x8x4xf32, #tpu.memory_space<vmem>>, vector<1x1x8x4xf32>
      %108 = vector.shape_cast %107 : vector<1x1x8x4xf32> to vector<8x4xf32>
      %cst_116 = arith.constant dense<0.000000e+00> : vector<16x4xf32>
      %109 = tpu.matmul %30, %108, %cst_116 {dimension_numbers = #tpu.dot_dimension_numbers<[1], [0], [0], [1], [0, 0, 1, 1], [], []>} : vector<16x8xf32>, vector<8x4xf32>, vector<16x4xf32> -> vector<16x4xf32>
      %110 = arith.addf %106, %109 : vector<16x4xf32>
      %cst_117 = arith.constant 0.000000e+00 : f32
      %111 = vector.broadcast %cst_117 : f32 to vector<16x4xf32>
      %112 = arith.maximumf %110, %111 : vector<16x4xf32>
      %c0_118 = arith.constant 0 : index
      %c1_119 = arith.constant 1 : index
      %c0_120 = arith.constant 0 : index
      %113 = arith.index_cast %arg9 : i32 to index
      %c0_121 = arith.constant 0 : index
      %c0_122 = arith.constant 0 : index
      %114 = vector.load %arg6[%c0_118, %c1_119, %c0_120, %113, %c0_121, %c0_122] : memref<1x2x2x16x16x4xf32, #tpu.memory_space<vmem>>, vector<1x1x1x1x16x4xf32>
      %115 = vector.shape_cast %114 : vector<1x1x1x1x16x4xf32> to vector<16x4xf32>
      %116 = vector.shape_cast %112 : vector<16x4xf32> to vector<1x1x1x1x16x4xf32>
      tpu.vector_store %arg6[%c0_118, %c1_119, %c0_120, %113, %c0_121, %c0_122], %116 {strides = array<i32>} : memref<1x2x2x16x16x4xf32, #tpu.memory_space<vmem>>, vector<1x1x1x1x16x4xf32>,
      %c0_123 = arith.constant 0 : index
      %c0_124 = arith.constant 0 : index
      %c0_125 = arith.constant 0 : index
      %c0_126 = arith.constant 0 : index
      %117 = vector.load %arg4[%c0_123, %c0_124, %c0_125, %c0_126] : memref<4x4x8x4xf32, #tpu.memory_space<vmem>>, vector<1x1x8x4xf32>
      %118 = vector.shape_cast %117 : vector<1x1x8x4xf32> to vector<8x4xf32>
      %cst_127 = arith.constant dense<0.000000e+00> : vector<16x4xf32>
      %119 = tpu.matmul %50, %118, %cst_127 {dimension_numbers = #tpu.dot_dimension_numbers<[1], [0], [0], [1], [0, 0, 1, 1], [], []>} : vector<16x8xf32>, vector<8x4xf32>, vector<16x4xf32> -> vector<16x4xf32>
      %120 = arith.addf %12, %119 : vector<16x4xf32>
      %c0_128 = arith.constant 0 : index
      %c2_129 = arith.constant 2 : index
      %c0_130 = arith.constant 0 : index
      %c0_131 = arith.constant 0 : index
      %121 = vector.load %arg4[%c0_128, %c2_129, %c0_130, %c0_131] : memref<4x4x8x4xf32, #tpu.memory_space<vmem>>, vector<1x1x8x4xf32>
      %122 = vector.shape_cast %121 : vector<1x1x8x4xf32> to vector<8x4xf32>
      %cst_132 = arith.constant dense<0.000000e+00> : vector<16x4xf32>
      %123 = tpu.matmul %46, %122, %cst_132 {dimension_numbers = #tpu.dot_dimension_numbers<[1], [0], [0], [1], [0, 0, 1, 1], [], []>} : vector<16x8xf32>, vector<8x4xf32>, vector<16x4xf32> -> vector<16x4xf32>
      %124 = arith.addf %120, %123 : vector<16x4xf32>
      %c2_133 = arith.constant 2 : index
      %c0_134 = arith.constant 0 : index
      %c0_135 = arith.constant 0 : index
      %c0_136 = arith.constant 0 : index
      %125 = vector.load %arg4[%c2_133, %c0_134, %c0_135, %c0_136] : memref<4x4x8x4xf32, #tpu.memory_space<vmem>>, vector<1x1x8x4xf32>
      %126 = vector.shape_cast %125 : vector<1x1x8x4xf32> to vector<8x4xf32>
      %cst_137 = arith.constant dense<0.000000e+00> : vector<16x4xf32>
      %127 = tpu.matmul %38, %126, %cst_137 {dimension_numbers = #tpu.dot_dimension_numbers<[1], [0], [0], [1], [0, 0, 1, 1], [], []>} : vector<16x8xf32>, vector<8x4xf32>, vector<16x4xf32> -> vector<16x4xf32>
      %128 = arith.addf %124, %127 : vector<16x4xf32>
      %c2_138 = arith.constant 2 : index
      %c2_139 = arith.constant 2 : index
      %c0_140 = arith.constant 0 : index
      %c0_141 = arith.constant 0 : index
      %129 = vector.load %arg4[%c2_138, %c2_139, %c0_140, %c0_141] : memref<4x4x8x4xf32, #tpu.memory_space<vmem>>, vector<1x1x8x4xf32>
      %130 = vector.shape_cast %129 : vector<1x1x8x4xf32> to vector<8x4xf32>
      %cst_142 = arith.constant dense<0.000000e+00> : vector<16x4xf32>
      %131 = tpu.matmul %34, %130, %cst_142 {dimension_numbers = #tpu.dot_dimension_numbers<[1], [0], [0], [1], [0, 0, 1, 1], [], []>} : vector<16x8xf32>, vector<8x4xf32>, vector<16x4xf32> -> vector<16x4xf32>
      %132 = arith.addf %128, %131 : vector<16x4xf32>
      %cst_143 = arith.constant 0.000000e+00 : f32
      %133 = vector.broadcast %cst_143 : f32 to vector<16x4xf32>
      %134 = arith.maximumf %132, %133 : vector<16x4xf32>
      %c0_144 = arith.constant 0 : index
      %c1_145 = arith.constant 1 : index
      %c1_146 = arith.constant 1 : index
      %135 = arith.index_cast %arg9 : i32 to index
      %c0_147 = arith.constant 0 : index
      %c0_148 = arith.constant 0 : index
      %136 = vector.load %arg6[%c0_144, %c1_145, %c1_146, %135, %c0_147, %c0_148] : memref<1x2x2x16x16x4xf32, #tpu.memory_space<vmem>>, vector<1x1x1x1x16x4xf32>
      %137 = vector.shape_cast %136 : vector<1x1x1x1x16x4xf32> to vector<16x4xf32>
      %138 = vector.shape_cast %134 : vector<16x4xf32> to vector<1x1x1x1x16x4xf32>
      tpu.vector_store %arg6[%c0_144, %c1_145, %c1_146, %135, %c0_147, %c0_148], %138 {strides = array<i32>} : memref<1x2x2x16x16x4xf32, #tpu.memory_space<vmem>>, vector<1x1x1x1x16x4xf32>,
    }
    %c16_i32_20 = arith.constant 16 : i32
    return
  }
  func.func @transform_0(%arg0: i32) -> (i32, i32, i32, i32) {
    %c0_i32 = arith.constant 0 : i32
    %c0_i32_0 = arith.constant 0 : i32
    %c0_i32_1 = arith.constant 0 : i32
    %c0_i32_2 = arith.constant 0 : i32
    return %arg0, %c0_i32, %c0_i32_0, %c0_i32_1 : i32, i32, i32, i32
  }
  func.func @transform_1(%arg0: i32) -> (i32, i32, i32, i32) {
    %c0_i32 = arith.constant 0 : i32
    %c0_i32_0 = arith.constant 0 : i32
    %c0_i32_1 = arith.constant 0 : i32
    %c0_i32_2 = arith.constant 0 : i32
    %c0_i32_3 = arith.constant 0 : i32
    return %c0_i32, %c0_i32_0, %c0_i32_1, %c0_i32_2 : i32, i32, i32, i32
  }
  func.func @transform_2(%arg0: i32) -> (i32, i32) {
    %c0_i32 = arith.constant 0 : i32
    %c0_i32_0 = arith.constant 0 : i32
    %c0_i32_1 = arith.constant 0 : i32
    return %c0_i32, %c0_i32_0 : i32, i32
  }
  func.func @transform_3(%arg0: i32) -> (i32, i32, i32, i32) {
    %c0_i32 = arith.constant 0 : i32
    %c0_i32_0 = arith.constant 0 : i32
    %c0_i32_1 = arith.constant 0 : i32
    %c0_i32_2 = arith.constant 0 : i32
    %c0_i32_3 = arith.constant 0 : i32
    return %c0_i32, %c0_i32_0, %c0_i32_1, %c0_i32_2 : i32, i32, i32, i32
  }
  func.func @transform_4(%arg0: i32) -> (i32, i32) {
    %c0_i32 = arith.constant 0 : i32
    %c0_i32_0 = arith.constant 0 : i32
    %c0_i32_1 = arith.constant 0 : i32
    return %c0_i32, %c0_i32_0 : i32, i32
  }
  func.func @transform_5(%arg0: i32) -> (i32, i32, i32, i32, i32, i32) {
    %c0_i32 = arith.constant 0 : i32
    %c0_i32_0 = arith.constant 0 : i32
    %c0_i32_1 = arith.constant 0 : i32
    %c0_i32_2 = arith.constant 0 : i32
    %c0_i32_3 = arith.constant 0 : i32
    %c0_i32_4 = arith.constant 0 : i32
    return %arg0, %c0_i32, %c0_i32_0, %c0_i32_1, %c0_i32_2, %c0_i32_3 : i32, i32, i32, i32, i32, i32
  }
}

</mosaic_0001>

<llo_original>
// kernel: decoder_block_resnet.1
$region0: #{decoder_block_resnet.1}
  #allocation0 [shape = 'u32[]', space=smem, size = 0x4, offset = 0x4, fixed_abs, tag = 'smem constant byte address 0x4 - core index']
  #allocation1 [shape = 'u32[72,128]{1,0:T(1,128)}', space=vmem, size = 0x9000, scoped, tag = 'internal scratch']
  #allocation2 [shape = 'f32[18,18,4]{2,1,0:T(8,128)}', space=vmem, size = 0x36000, scoped, tag = 'scratch operand']
  #allocation3 [shape = 'f32[18,18,8]{2,1,0:T(8,128)}', space=vmem, size = 0x36000, scoped, tag = 'scratch operand']
  %s0 = inlined_call_operand.vmem [shape: f32[2,16,16,4], index: 0, kind: input, shape index: {}]
  %s1 = inlined_call_operand.vmem [shape: f32[3,3,4,8], index: 1, kind: input, shape index: {}]
  %s2 = inlined_call_operand.vmem [shape: f32[1,8], index: 2, kind: input, shape index: {}]
  %s3 = inlined_call_operand.vmem [shape: f32[4,4,8,4], index: 3, kind: input, shape index: {}]
  %s4 = inlined_call_operand.vmem [shape: f32[1,4], index: 4, kind: input, shape index: {}]
  %s5 = inlined_call_operand.vmem [shape: f32[2,2,2,16,16,4], index: 5, kind: output, shape index: {}]
  %s6 = sld [smem:[#allocation0]]
  $region67: #{decoder_block_resnet.1} parent=0
    _
  %s8 = ssub.s32 1, %s6
  %s9 = scalar_select 0, %s8, %s6
  loop: start=0, step=1, limit=4
  $region2: #{decoder_block_resnet.1} parent=0 // loop_pre_header
    _
  $region3: #{decoder_block_resnet.1} parent=0 // loop_header
    %s11 = sphi 0, %s15
    %p12 = scmp.ge.s32.totalorder %s11, 4
    %s21 = sphi 0, %s23
    %s24 = sphi 0, %s21
    %s25 = sphi 0, %s24
    %s41 = sphi 0, %s25
    %s45 = sphi 0, %s45
    %s47 = sphi 0, %s45
    %s48 = sphi 0, %s47
    %s62 = sphi 0, %s48
    %s66 = sphi 0, %s66
    %s68 = sphi 0, %s66
    %s69 = sphi 0, %s68
    %s83 = sphi 0, %s69
    %s87 = sphi 0, %s87
    %s89 = sphi 0, %s87
    %s90 = sphi 0, %s89
    %s104 = sphi 0, %s90
    %s108 = sphi 0, %s108
    %s110 = sphi 0, %s108
    %s111 = sphi 0, %s110
    %s125 = sphi 0, %s111
    %s131 = sphi 0, %s133
    %s134 = sphi 0, %s131
    %s135 = sphi 0, %s134
    %s151 = sphi 0, %s135
  $region4: #{decoder_block_resnet.1} parent=0 // loop_header_branch
    %14 = sbr.rel (%p12) target = $region8
  $region5: #{decoder_block_resnet.1} parent=0 // loop_body
    %s16 = ssub.s32 %s11, 1
    %s17 = ssub.s32 %s11, 2
    %s18 = sadd.s32 %s11, 1
    %s19 = ssub.s32 %s11, %s18
    %p20 = scmp.eq.s32.totalorder %s19, 0
    %s22 = sadd.s32 %s21, 1
    %s23 = scalar_select %p20, %s21, %s22
    %p26 = pneg %p20
    %p27 = scmp.eq.s32.totalorder %s11, 1
    %p28 = por %p26, %p27
    %p29 = scmp.ne.s32.totalorder %s21, %s24
    %p30 = scmp.eq.s32.totalorder %s11, 0
    %p31 = por %p29, %p30
    %p32 = scmp.ne.s32.totalorder %s21, %s24
    %p33 = scmp.eq.s32.totalorder %s16, 1
    %p34 = por %p32, %p33
    %p35 = scmp.ne.s32.totalorder %s24, %s25
    %p36 = scmp.eq.s32.totalorder %s16, 0
    %p37 = por %p35, %p36
    %p38 = scmp.ne.s32.totalorder %s24, %s25
    %p39 = scmp.eq.s32.totalorder %s17, 1
    %p40 = por %p38, %p39
    %p42 = scmp.ne.s32.totalorder %s25, %s41
    %p43 = scmp.eq.s32.totalorder %s17, 0
    %p44 = por %p42, %p43
    %s46 = sadd.s32 %s45, 1
    %p49 = scmp.eq.s32.totalorder %s11, 1
    %p50 = scmp.ne.s32.totalorder %s45, %s47
    %p51 = scmp.eq.s32.totalorder %s11, 0
    %p52 = por %p50, %p51
    %p53 = scmp.ne.s32.totalorder %s45, %s47
    %p54 = scmp.eq.s32.totalorder %s16, 1
    %p55 = por %p53, %p54
    %p56 = scmp.ne.s32.totalorder %s47, %s48
    %p57 = scmp.eq.s32.totalorder %s16, 0
    %p58 = por %p56, %p57
    %p59 = scmp.ne.s32.totalorder %s47, %s48
    %p60 = scmp.eq.s32.totalorder %s17, 1
    %p61 = por %p59, %p60
    %p63 = scmp.ne.s32.totalorder %s48, %s62
    %p64 = scmp.eq.s32.totalorder %s17, 0
    %p65 = por %p63, %p64
    %s67 = sadd.s32 %s66, 1
    %p70 = scmp.eq.s32.totalorder %s11, 1
    %p71 = scmp.ne.s32.totalorder %s66, %s68
    %p72 = scmp.eq.s32.totalorder %s11, 0
    %p73 = por %p71, %p72
    %p74 = scmp.ne.s32.totalorder %s66, %s68
    %p75 = scmp.eq.s32.totalorder %s16, 1
    %p76 = por %p74, %p75
    %p77 = scmp.ne.s32.totalorder %s68, %s69
    %p78 = scmp.eq.s32.totalorder %s16, 0
    %p79 = por %p77, %p78
    %p80 = scmp.ne.s32.totalorder %s68, %s69
    %p81 = scmp.eq.s32.totalorder %s17, 1
    %p82 = por %p80, %p81
    %p84 = scmp.ne.s32.totalorder %s69, %s83
    %p85 = scmp.eq.s32.totalorder %s17, 0
    %p86 = por %p84, %p85
    %s88 = sadd.s32 %s87, 1
    %p91 = scmp.eq.s32.totalorder %s11, 1
    %p92 = scmp.ne.s32.totalorder %s87, %s89
    %p93 = scmp.eq.s32.totalorder %s11, 0
    %p94 = por %p92, %p93
    %p95 = scmp.ne.s32.totalorder %s87, %s89
    %p96 = scmp.eq.s32.totalorder %s16, 1
    %p97 = por %p95, %p96
    %p98 = scmp.ne.s32.totalorder %s89, %s90
    %p99 = scmp.eq.s32.totalorder %s16, 0
    %p100 = por %p98, %p99
    %p101 = scmp.ne.s32.totalorder %s89, %s90
    %p102 = scmp.eq.s32.totalorder %s17, 1
    %p103 = por %p101, %p102
    %p105 = scmp.ne.s32.totalorder %s90, %s104
    %p106 = scmp.eq.s32.totalorder %s17, 0
    %p107 = por %p105, %p106
    %s109 = sadd.s32 %s108, 1
    %p112 = scmp.eq.s32.totalorder %s11, 1
    %p113 = scmp.ne.s32.totalorder %s108, %s110
    %p114 = scmp.eq.s32.totalorder %s11, 0
    %p115 = por %p113, %p114
    %p116 = scmp.ne.s32.totalorder %s108, %s110
    %p117 = scmp.eq.s32.totalorder %s16, 1
    %p118 = por %p116, %p117
    %p119 = scmp.ne.s32.totalorder %s110, %s111
    %p120 = scmp.eq.s32.totalorder %s16, 0
    %p121 = por %p119, %p120
    %p122 = scmp.ne.s32.totalorder %s110, %s111
    %p123 = scmp.eq.s32.totalorder %s17, 1
    %p124 = por %p122, %p123
    %p126 = scmp.ne.s32.totalorder %s111, %s125
    %p127 = scmp.eq.s32.totalorder %s17, 0
    %p128 = por %p126, %p127
    %s129 = ssub.s32 %s11, %s18
    %p130 = scmp.eq.s32.totalorder %s129, 0
    %s132 = sadd.s32 %s131, 1
    %s133 = scalar_select %p130, %s131, %s132
    %p136 = pneg %p130
    %p137 = scmp.eq.s32.totalorder %s11, 1
    %p138 = por %p136, %p137
    %p139 = scmp.ne.s32.totalorder %s131, %s134
    %p140 = scmp.eq.s32.totalorder %s11, 0
    %p141 = por %p139, %p140
    %p142 = scmp.ne.s32.totalorder %s131, %s134
    %p143 = scmp.eq.s32.totalorder %s16, 1
    %p144 = por %p142, %p143
    %p145 = scmp.ne.s32.totalorder %s134, %s135
    %p146 = scmp.eq.s32.totalorder %s16, 0
    %p147 = por %p145, %p146
    %p148 = scmp.ne.s32.totalorder %s134, %s135
    %p149 = scmp.eq.s32.totalorder %s17, 1
    %p150 = por %p148, %p149
    %p152 = scmp.ne.s32.totalorder %s135, %s151
    %p153 = scmp.eq.s32.totalorder %s17, 0
    %p154 = por %p152, %p153
    %p155 = scmp.le.s32.totalorder 1, %s11
    %p156 = scmp.lt.s32.totalorder %s11, 3
    %p157 = pnand %p155, %p156
    %p158 = pneg %p157
    // Predicated region
    $region9: #{decoder_block_resnet.1} parent=5 // pred_check
      _
    $region10: #{decoder_block_resnet.1} parent=5 // pred_check_branch
      %160 = sbr.rel (%p157) target = $region12
    $region11: #{decoder_block_resnet.1} parent=5 // pred_region
      %s161 = ssub.s32 %s11, 1
      // Predicated region
      $region13: #{decoder_block_resnet.1} parent=11 // pred_check
        %p162 = pneg %p58
      $region14: #{decoder_block_resnet.1} parent=11 // pred_check_branch
        %164 = sbr.rel (%p162) target = $region16
      $region15: #{decoder_block_resnet.1} parent=11 // pred_region
        _
      $region16: #{decoder_block_resnet.1} parent=11 // pred_fallthru
        _
      // Predicated region
      $region17: #{decoder_block_resnet.1} parent=11 // pred_check
        %p165 = pneg %p79
      $region18: #{decoder_block_resnet.1} parent=11 // pred_check_branch
        %167 = sbr.rel (%p165) target = $region20
      $region19: #{decoder_block_resnet.1} parent=11 // pred_region
        _
      $region20: #{decoder_block_resnet.1} parent=11 // pred_fallthru
        _
      // Predicated region
      $region21: #{decoder_block_resnet.1} parent=11 // pred_check
        %p168 = pneg %p100
      $region22: #{decoder_block_resnet.1} parent=11 // pred_check_branch
        %170 = sbr.rel (%p168) target = $region24
      $region23: #{decoder_block_resnet.1} parent=11 // pred_region
        _
      $region24: #{decoder_block_resnet.1} parent=11 // pred_fallthru
        _
      // Predicated region
      $region25: #{decoder_block_resnet.1} parent=11 // pred_check
        %p171 = pneg %p121
      $region26: #{decoder_block_resnet.1} parent=11 // pred_check_branch
        %173 = sbr.rel (%p171) target = $region28
      $region27: #{decoder_block_resnet.1} parent=11 // pred_region
        _
      $region28: #{decoder_block_resnet.1} parent=11 // pred_fallthru
        _
    $region12: #{decoder_block_resnet.1} parent=5 // pred_fallthru
      _
    %p174 = scmp.lt.s32.totalorder %s11, 2
    // Predicated region
    $region29: #{decoder_block_resnet.1} parent=5 // pred_check
      %p175 = pneg %p174
    $region30: #{decoder_block_resnet.1} parent=5 // pred_check_branch
      %177 = sbr.rel (%p175) target = $region32
    $region31: #{decoder_block_resnet.1} parent=5 // pred_region
      // Predicated region
      $region33: #{decoder_block_resnet.1} parent=31 // pred_check
        %p178 = pneg %p31
      $region34: #{decoder_block_resnet.1} parent=31 // pred_check_branch
        %180 = sbr.rel (%p178) target = $region36
      $region35: #{decoder_block_resnet.1} parent=31 // pred_region
        %p181 = scmp.lt.s32.totalorder %s11, 1
        %s182 = scalar_select %p181, %s11, 1
        %s183 = smul.addr %s182, 32
        %s184 = smul.addr %s183, 8
        %s185 = scalar_lea.vmem %s0, %s184
      $region36: #{decoder_block_resnet.1} parent=31 // pred_fallthru
        _
    $region32: #{decoder_block_resnet.1} parent=5 // pred_fallthru
      _
    %p186 = scmp.le.s32.totalorder 1, %s11
    %p187 = scmp.lt.s32.totalorder %s11, 3
    %p188 = pnand %p186, %p187
    %p189 = pneg %p188
    // Predicated region
    $region37: #{decoder_block_resnet.1} parent=5 // pred_check
      _
    $region38: #{decoder_block_resnet.1} parent=5 // pred_check_branch
      %191 = sbr.rel (%p188) target = $region40
    $region39: #{decoder_block_resnet.1} parent=5 // pred_region
      %s192 = ssub.s32 %s11, 1
      %p193 = scmp.lt.s32.totalorder %s16, 1
      %s194 = scalar_select %p193, %s16, 1
      %s195 = smul.addr %s194, 32
      %s196 = smul.addr %s195, 8
      %s197 = scalar_lea.vmem %s0, %s196
      %p198 = pneg %p37
      %p199 = pneg %p34
      %p200 = pneg %p58
      %p201 = pneg %p55
      %p202 = pneg %p79
      %p203 = pneg %p76
      %p204 = pneg %p100
      %p205 = pneg %p97
      %p206 = pneg %p121
      %p207 = pneg %p118
      %p208 = pneg %p147
      %p209 = pneg %p144
      %p210 = scmp.lt.s32.totalorder %s16, 1
      %s211 = scalar_select %p210, %s16, 1
      %s212 = smul.addr %s211, 128
      %s213 = smul.addr %s212, 8
      %s214 = scalar_lea.vmem %s5, %s213
      %p215 = scmp.lt.s32.totalorder %s16, 1
      %s216 = scalar_select %p215, %s16, 1
      %s217 = smul.addr %s216, 32
      %s218 = smul.addr %s217, 8
      %s219 = scalar_lea.vmem %s0, %s218
      %p220 = scmp.lt.s32.totalorder %s16, 1
      %s221 = scalar_select %p220, %s16, 1
      %s222 = smul.addr %s221, 128
      %s223 = smul.addr %s222, 8
      %s224 = scalar_lea.vmem %s5, %s223
      %vm225 = vcmask 31744
      %226 = vst.msk [vmem:[#allocation2] sm:$0xff] %vm225, 0.0
      %227 = vst.msk [vmem:[#allocation2 + $0x8] sm:$0xff] %vm225, 0.0
      %vm228 = vcmask 25600
      %229 = vst.msk [vmem:[#allocation2 + $0x10] sm:$0x3] %vm228, 0.0
      %230 = vst.msk [vmem:[#allocation2 + $0x18] sm:$0xff] %vm225, 0.0
      %231 = vst.msk [vmem:[#allocation2 + $0x20] sm:$0xff] %vm225, 0.0
      %232 = vst.msk [vmem:[#allocation2 + $0x28] sm:$0x3] %vm228, 0.0
      %233 = vst.msk [vmem:[#allocation2 + $0x30] sm:$0xff] %vm225, 0.0
      %234 = vst.msk [vmem:[#allocation2 + $0x38] sm:$0xff] %vm225, 0.0
      %235 = vst.msk [vmem:[#allocation2 + $0x40] sm:$0x3] %vm228, 0.0
      %236 = vst.msk [vmem:[#allocation2 + $0x48] sm:$0xff] %vm225, 0.0
      %237 = vst.msk [vmem:[#allocation2 + $0x50] sm:$0xff] %vm225, 0.0
      %238 = vst.msk [vmem:[#allocation2 + $0x58] sm:$0x3] %vm228, 0.0
      %239 = vst.msk [vmem:[#allocation2 + $0x60] sm:$0xff] %vm225, 0.0
      %240 = vst.msk [vmem:[#allocation2 + $0x68] sm:$0xff] %vm225, 0.0
      %241 = vst.msk [vmem:[#allocation2 + $0x70] sm:$0x3] %vm228, 0.0
      %242 = vst.msk [vmem:[#allocation2 + $0x78] sm:$0xff] %vm225, 0.0
      %243 = vst.msk [vmem:[#allocation2 + $0x80] sm:$0xff] %vm225, 0.0
      %244 = vst.msk [vmem:[#allocation2 + $0x88] sm:$0x3] %vm228, 0.0
      %245 = vst.msk [vmem:[#allocation2 + $0x90] sm:$0xff] %vm225, 0.0
      %246 = vst.msk [vmem:[#allocation2 + $0x98] sm:$0xff] %vm225, 0.0
      %247 = vst.msk [vmem:[#allocation2 + $0xa0] sm:$0x3] %vm228, 0.0
      %248 = vst.msk [vmem:[#allocation2 + $0xa8] sm:$0xff] %vm225, 0.0
      %249 = vst.msk [vmem:[#allocation2 + $0xb0] sm:$0xff] %vm225, 0.0
      %250 = vst.msk [vmem:[#allocation2 + $0xb8] sm:$0x3] %vm228, 0.0
      %251 = vst.msk [vmem:[#allocation2 + $0xc0] sm:$0xff] %vm225, 0.0
      %252 = vst.msk [vmem:[#allocation2 + $0xc8] sm:$0xff] %vm225, 0.0
      %253 = vst.msk [vmem:[#allocation2 + $0xd0] sm:$0x3] %vm228, 0.0
      %254 = vst.msk [vmem:[#allocation2 + $0xd8] sm:$0xff] %vm225, 0.0
      %255 = vst.msk [vmem:[#allocation2 + $0xe0] sm:$0xff] %vm225, 0.0
      %256 = vst.msk [vmem:[#allocation2 + $0xe8] sm:$0x3] %vm228, 0.0
      %257 = vst.msk [vmem:[#allocation2 + $0xf0] sm:$0xff] %vm225, 0.0
      %258 = vst.msk [vmem:[#allocation2 + $0xf8] sm:$0xff] %vm225, 0.0
      %259 = vst.msk [vmem:[#allocation2 + $0x100] sm:$0x3] %vm228, 0.0
      %260 = vst.msk [vmem:[#allocation2 + $0x108] sm:$0xff] %vm225, 0.0
      %261 = vst.msk [vmem:[#allocation2 + $0x110] sm:$0xff] %vm225, 0.0
      %262 = vst.msk [vmem:[#allocation2 + $0x118] sm:$0x3] %vm228, 0.0
      %263 = vst.msk [vmem:[#allocation2 + $0x120] sm:$0xff] %vm225, 0.0
      %264 = vst.msk [vmem:[#allocation2 + $0x128] sm:$0xff] %vm225, 0.0
      %265 = vst.msk [vmem:[#allocation2 + $0x130] sm:$0x3] %vm228, 0.0
      %266 = vst.msk [vmem:[#allocation2 + $0x138] sm:$0xff] %vm225, 0.0
      %267 = vst.msk [vmem:[#allocation2 + $0x140] sm:$0xff] %vm225, 0.0
      %268 = vst.msk [vmem:[#allocation2 + $0x148] sm:$0x3] %vm228, 0.0
      %269 = vst.msk [vmem:[#allocation2 + $0x150] sm:$0xff] %vm225, 0.0
      %270 = vst.msk [vmem:[#allocation2 + $0x158] sm:$0xff] %vm225, 0.0
      %271 = vst.msk [vmem:[#allocation2 + $0x160] sm:$0x3] %vm228, 0.0
      %272 = vst.msk [vmem:[#allocation2 + $0x168] sm:$0xff] %vm225, 0.0
      %273 = vst.msk [vmem:[#allocation2 + $0x170] sm:$0xff] %vm225, 0.0
      %274 = vst.msk [vmem:[#allocation2 + $0x178] sm:$0x3] %vm228, 0.0
      %275 = vst.msk [vmem:[#allocation2 + $0x180] sm:$0xff] %vm225, 0.0
      %276 = vst.msk [vmem:[#allocation2 + $0x188] sm:$0xff] %vm225, 0.0
      %277 = vst.msk [vmem:[#allocation2 + $0x190] sm:$0x3] %vm228, 0.0
      %278 = vst.msk [vmem:[#allocation2 + $0x198] sm:$0xff] %vm225, 0.0
      %279 = vst.msk [vmem:[#allocation2 + $0x1a0] sm:$0xff] %vm225, 0.0
      %280 = vst.msk [vmem:[#allocation2 + $0x1a8] sm:$0x3] %vm228, 0.0
      %vm281 = vcmask 64512
      %282 = vst.msk [vmem:[#allocation3] sm:$0xff] %vm281, 0.0
      %283 = vst.msk [vmem:[#allocation3 + $0x8] sm:$0xff] %vm281, 0.0
      %vm284 = vcmask 58368
      %285 = vst.msk [vmem:[#allocation3 + $0x10] sm:$0x3] %vm284, 0.0
      %286 = vst.msk [vmem:[#allocation3 + $0x18] sm:$0xff] %vm281, 0.0
      %287 = vst.msk [vmem:[#allocation3 + $0x20] sm:$0xff] %vm281, 0.0
      %288 = vst.msk [vmem:[#allocation3 + $0x28] sm:$0x3] %vm284, 0.0
      %289 = vst.msk [vmem:[#allocation3 + $0x30] sm:$0xff] %vm281, 0.0
      %290 = vst.msk [vmem:[#allocation3 + $0x38] sm:$0xff] %vm281, 0.0
      %291 = vst.msk [vmem:[#allocation3 + $0x40] sm:$0x3] %vm284, 0.0
      %292 = vst.msk [vmem:[#allocation3 + $0x48] sm:$0xff] %vm281, 0.0
      %293 = vst.msk [vmem:[#allocation3 + $0x50] sm:$0xff] %vm281, 0.0
      %294 = vst.msk [vmem:[#allocation3 + $0x58] sm:$0x3] %vm284, 0.0
      %295 = vst.msk [vmem:[#allocation3 + $0x60] sm:$0xff] %vm281, 0.0
      %296 = vst.msk [vmem:[#allocation3 + $0x68] sm:$0xff] %vm281, 0.0
      %297 = vst.msk [vmem:[#allocation3 + $0x70] sm:$0x3] %vm284, 0.0
      %298 = vst.msk [vmem:[#allocation3 + $0x78] sm:$0xff] %vm281, 0.0
      %299 = vst.msk [vmem:[#allocation3 + $0x80] sm:$0xff] %vm281, 0.0
      %300 = vst.msk [vmem:[#allocation3 + $0x88] sm:$0x3] %vm284, 0.0
      %301 = vst.msk [vmem:[#allocation3 + $0x90] sm:$0xff] %vm281, 0.0
      %302 = vst.msk [vmem:[#allocation3 + $0x98] sm:$0xff] %vm281, 0.0
      %303 = vst.msk [vmem:[#allocation3 + $0xa0] sm:$0x3] %vm284, 0.0
      %304 = vst.msk [vmem:[#allocation3 + $0xa8] sm:$0xff] %vm281, 0.0
      %305 = vst.msk [vmem:[#allocation3 + $0xb0] sm:$0xff] %vm281, 0.0
      %306 = vst.msk [vmem:[#allocation3 + $0xb8] sm:$0x3] %vm284, 0.0
      %307 = vst.msk [vmem:[#allocation3 + $0xc0] sm:$0xff] %vm281, 0.0
      %308 = vst.msk [vmem:[#allocation3 + $0xc8] sm:$0xff] %vm281, 0.0
      %309 = vst.msk [vmem:[#allocation3 + $0xd0] sm:$0x3] %vm284, 0.0
      %310 = vst.msk [vmem:[#allocation3 + $0xd8] sm:$0xff] %vm281, 0.0
      %311 = vst.msk [vmem:[#allocation3 + $0xe0] sm:$0xff] %vm281, 0.0
      %312 = vst.msk [vmem:[#allocation3 + $0xe8] sm:$0x3] %vm284, 0.0
      %313 = vst.msk [vmem:[#allocation3 + $0xf0] sm:$0xff] %vm281, 0.0
      %314 = vst.msk [vmem:[#allocation3 + $0xf8] sm:$0xff] %vm281, 0.0
      %315 = vst.msk [vmem:[#allocation3 + $0x100] sm:$0x3] %vm284, 0.0
      %316 = vst.msk [vmem:[#allocation3 + $0x108] sm:$0xff] %vm281, 0.0
      %317 = vst.msk [vmem:[#allocation3 + $0x110] sm:$0xff] %vm281, 0.0
      %318 = vst.msk [vmem:[#allocation3 + $0x118] sm:$0x3] %vm284, 0.0
      %319 = vst.msk [vmem:[#allocation3 + $0x120] sm:$0xff] %vm281, 0.0
      %320 = vst.msk [vmem:[#allocation3 + $0x128] sm:$0xff] %vm281, 0.0
      %321 = vst.msk [vmem:[#allocation3 + $0x130] sm:$0x3] %vm284, 0.0
      %322 = vst.msk [vmem:[#allocation3 + $0x138] sm:$0xff] %vm281, 0.0
      %323 = vst.msk [vmem:[#allocation3 + $0x140] sm:$0xff] %vm281, 0.0
      %324 = vst.msk [vmem:[#allocation3 + $0x148] sm:$0x3] %vm284, 0.0
      %325 = vst.msk [vmem:[#allocation3 + $0x150] sm:$0xff] %vm281, 0.0
      %326 = vst.msk [vmem:[#allocation3 + $0x158] sm:$0xff] %vm281, 0.0
      %327 = vst.msk [vmem:[#allocation3 + $0x160] sm:$0x3] %vm284, 0.0
      %328 = vst.msk [vmem:[#allocation3 + $0x168] sm:$0xff] %vm281, 0.0
      %329 = vst.msk [vmem:[#allocation3 + $0x170] sm:$0xff] %vm281, 0.0
      %330 = vst.msk [vmem:[#allocation3 + $0x178] sm:$0x3] %vm284, 0.0
      %331 = vst.msk [vmem:[#allocation3 + $0x180] sm:$0xff] %vm281, 0.0
      %332 = vst.msk [vmem:[#allocation3 + $0x188] sm:$0xff] %vm281, 0.0
      %333 = vst.msk [vmem:[#allocation3 + $0x190] sm:$0x3] %vm284, 0.0
      %334 = vst.msk [vmem:[#allocation3 + $0x198] sm:$0xff] %vm281, 0.0
      %335 = vst.msk [vmem:[#allocation3 + $0x1a0] sm:$0xff] %vm281, 0.0
      %336 = vst.msk [vmem:[#allocation3 + $0x1a8] sm:$0x3] %vm284, 0.0
      %v337 = vld [vmem:[%s219] sm:$0xff]
      %v338 = vld [vmem:[%s219 + $0x8] sm:$0xff]
      %v339 = vld [vmem:[%s219 + $0x10] sm:$0xff]
      %v340 = vld [vmem:[%s219 + $0x18] sm:$0xff]
      %v341 = vld [vmem:[%s219 + $0x20] sm:$0xff]
      %v342 = vld [vmem:[%s219 + $0x28] sm:$0xff]
      %v343 = vld [vmem:[%s219 + $0x30] sm:$0xff]
      %v344 = vld [vmem:[%s219 + $0x38] sm:$0xff]
      %v345 = vld [vmem:[%s219 + $0x40] sm:$0xff]
      %v346 = vld [vmem:[%s219 + $0x48] sm:$0xff]
      %v347 = vld [vmem:[%s219 + $0x50] sm:$0xff]
      %v348 = vld [vmem:[%s219 + $0x58] sm:$0xff]
      %v349 = vld [vmem:[%s219 + $0x60] sm:$0xff]
      %v350 = vld [vmem:[%s219 + $0x68] sm:$0xff]
      %v351 = vld [vmem:[%s219 + $0x70] sm:$0xff]
      %v352 = vld [vmem:[%s219 + $0x78] sm:$0xff]
      %v353 = vld [vmem:[%s219 + $0x80] sm:$0xff]
      %v354 = vld [vmem:[%s219 + $0x88] sm:$0xff]
      %v355 = vld [vmem:[%s219 + $0x90] sm:$0xff]
      %v356 = vld [vmem:[%s219 + $0x98] sm:$0xff]
      %v357 = vld [vmem:[%s219 + $0xa0] sm:$0xff]
      %v358 = vld [vmem:[%s219 + $0xa8] sm:$0xff]
      %v359 = vld [vmem:[%s219 + $0xb0] sm:$0xff]
      %v360 = vld [vmem:[%s219 + $0xb8] sm:$0xff]
      %v361 = vld [vmem:[%s219 + $0xc0] sm:$0xff]
      %v362 = vld [vmem:[%s219 + $0xc8] sm:$0xff]
      %v363 = vld [vmem:[%s219 + $0xd0] sm:$0xff]
      %v364 = vld [vmem:[%s219 + $0xd8] sm:$0xff]
      %v365 = vld [vmem:[%s219 + $0xe0] sm:$0xff]
      %v366 = vld [vmem:[%s219 + $0xe8] sm:$0xff]
      %v367 = vld [vmem:[%s219 + $0xf0] sm:$0xff]
      %v368 = vld [vmem:[%s219 + $0xf8] sm:$0xff]
      %s369 = scalar_lea.vmem [#allocation2], 24
      %370 = vst.msk [vmem:[%s369 + $0x1] sm:$0xff] %vm225, %v337
      %371 = vst.msk [vmem:[%s369 + $0x9] sm:$0xff] %vm225, %v338
      %372 = vst.msk [vmem:[%s369 + $0x19] sm:$0xff] %vm225, %v339
      %373 = vst.msk [vmem:[%s369 + $0x21] sm:$0xff] %vm225, %v340
      %374 = vst.msk [vmem:[%s369 + $0x31] sm:$0xff] %vm225, %v341
      %375 = vst.msk [vmem:[%s369 + $0x39] sm:$0xff] %vm225, %v342
      %376 = vst.msk [vmem:[%s369 + $0x49] sm:$0xff] %vm225, %v343
      %377 = vst.msk [vmem:[%s369 + $0x51] sm:$0xff] %vm225, %v344
      %378 = vst.msk [vmem:[%s369 + $0x61] sm:$0xff] %vm225, %v345
      %379 = vst.msk [vmem:[%s369 + $0x69] sm:$0xff] %vm225, %v346
      %380 = vst.msk [vmem:[%s369 + $0x79] sm:$0xff] %vm225, %v347
      %381 = vst.msk [vmem:[%s369 + $0x81] sm:$0xff] %vm225, %v348
      %382 = vst.msk [vmem:[%s369 + $0x91] sm:$0xff] %vm225, %v349
      %383 = vst.msk [vmem:[%s369 + $0x99] sm:$0xff] %vm225, %v350
      %384 = vst.msk [vmem:[%s369 + $0xa9] sm:$0xff] %vm225, %v351
      %385 = vst.msk [vmem:[%s369 + $0xb1] sm:$0xff] %vm225, %v352
      %386 = vst.msk [vmem:[%s369 + $0xc1] sm:$0xff] %vm225, %v353
      %387 = vst.msk [vmem:[%s369 + $0xc9] sm:$0xff] %vm225, %v354
      %388 = vst.msk [vmem:[%s369 + $0xd9] sm:$0xff] %vm225, %v355
      %389 = vst.msk [vmem:[%s369 + $0xe1] sm:$0xff] %vm225, %v356
      %390 = vst.msk [vmem:[%s369 + $0xf1] sm:$0xff] %vm225, %v357
      %391 = vst.msk [vmem:[%s369 + $0xf9] sm:$0xff] %vm225, %v358
      %392 = vst.msk [vmem:[%s369 + $0x109] sm:$0xff] %vm225, %v359
      %393 = vst.msk [vmem:[%s369 + $0x111] sm:$0xff] %vm225, %v360
      %394 = vst.msk [vmem:[%s369 + $0x121] sm:$0xff] %vm225, %v361
      %395 = vst.msk [vmem:[%s369 + $0x129] sm:$0xff] %vm225, %v362
      %396 = vst.msk [vmem:[%s369 + $0x139] sm:$0xff] %vm225, %v363
      %397 = vst.msk [vmem:[%s369 + $0x141] sm:$0xff] %vm225, %v364
      %398 = vst.msk [vmem:[%s369 + $0x151] sm:$0xff] %vm225, %v365
      %399 = vst.msk [vmem:[%s369 + $0x159] sm:$0xff] %vm225, %v366
      %400 = vst.msk [vmem:[%s369 + $0x169] sm:$0xff] %vm225, %v367
      %401 = vst.msk [vmem:[%s369 + $0x171] sm:$0xff] %vm225, %v368
      %v402 = vld [vmem:[%s2] sm:$0x1]
      %v404 = vperm.slane %v402, 0
      %v406 = vld [vmem:[%s4] sm:$0x1]
      %v408 = vperm.slane %v406, 0
      loop: start=0, step=1, limit=16
      $region41: #{decoder_block_resnet.1} parent=39 // loop_pre_header
        _
      $region42: #{decoder_block_resnet.1} parent=39 // loop_header
        %s411 = sphi 0, %s415
        %p412 = scmp.ge.s32.totalorder %s411, 16
      $region43: #{decoder_block_resnet.1} parent=39 // loop_header_branch
        %414 = sbr.rel (%p412) target = $region47
      $region44: #{decoder_block_resnet.1} parent=39 // loop_body
        %s416 = smul.u32 %s411, 24
        %s417 = scalar_lea.vmem [#allocation2], %s416
        %v418 = vld [vmem:[%s417] sm:$0xff]
        %v419 = vld [vmem:[%s417 + $0x8] sm:$0xff]
        %v420 = vld [vmem:[%s1] sm:$0xf]
        %v422 = vsel %vm225, %v418, 0
        %v425 = vsel %vm225, %v419, 0
        %vm427 = vcmask 1043456
        %v429 = vsel %vm427, %v420, 0
        %431 = vmatpush.msra.mxu0 0.0
        %432 = vmatpush.msra.mxu0 0.0
        %433 = vmatpush.msra.mxu0 0.0
        %434 = vmatpush.msra.mxu0 0.0
        %435 = vmatpush.msra.mxu0 0.0
        %436 = vmatpush.msra.mxu0 0.0
        %437 = vmatpush.msra.mxu0 0.0
        %438 = vmatpush.msra.mxu0 0.0
        %439 = vmatpush.msra.mxu0 0.0
        %440 = vmatpush.msra.mxu0 0.0
        %441 = vmatpush.msra.mxu0 0.0
        %442 = vmatpush.msra.mxu0 0.0
        %443 = vmatpush.msra.mxu0 0.0
        %444 = vmatpush.msra.mxu0 0.0
        %445 = vmatpush.msra.mxu0 0.0
        %446 = vmatpush.msra.mxu0 %v429
        %447 = vmatmul.f32.gmra.mxu0 %v422
        %v448 = vpop.f32.mrf.mxu0
        %v449 = vadd.f32 0.0, %v448
        %450 = vmatmul.f32.gmra.mxu0 %v425
        %v451 = vpop.f32.mrf.mxu0
        %v452 = vadd.f32 0.0, %v451
        %453 = vdwg.mxu0
        %v454 = vadd.f32 %v404, %v449
        %v455 = vadd.f32 %v404, %v452
        %v456 = vld [vmem:[%s417 + $0x1] sm:$0xff]
        %v457 = vld [vmem:[%s417 + $0x9] sm:$0xff]
        %s458 = scalar_lea.vmem %s1, 4
        %v459 = vld [vmem:[%s458] sm:$0xf]
        %v461 = vsel %vm225, %v456, 0
        %v464 = vsel %vm225, %v457, 0
        %v467 = vsel %vm427, %v459, 0
        %469 = vmatpush.msra.mxu0 0.0
        %470 = vmatpush.msra.mxu0 0.0
        %471 = vmatpush.msra.mxu0 0.0
        %472 = vmatpush.msra.mxu0 0.0
        %473 = vmatpush.msra.mxu0 0.0
        %474 = vmatpush.msra.mxu0 0.0
        %475 = vmatpush.msra.mxu0 0.0
        %476 = vmatpush.msra.mxu0 0.0
        %477 = vmatpush.msra.mxu0 0.0
        %478 = vmatpush.msra.mxu0 0.0
        %479 = vmatpush.msra.mxu0 0.0
        %480 = vmatpush.msra.mxu0 0.0
        %481 = vmatpush.msra.mxu0 0.0
        %482 = vmatpush.msra.mxu0 0.0
        %483 = vmatpush.msra.mxu0 0.0
        %484 = vmatpush.msra.mxu0 %v467
        %485 = vmatmul.f32.gmra.mxu0 %v461
        %v486 = vpop.f32.mrf.mxu0
        %v487 = vadd.f32 0.0, %v486
        %488 = vmatmul.f32.gmra.mxu0 %v464
        %v489 = vpop.f32.mrf.mxu0
        %v490 = vadd.f32 0.0, %v489
        %491 = vdwg.mxu0
        %v492 = vadd.f32 %v454, %v487
        %v493 = vadd.f32 %v455, %v490
        %v494 = vld [vmem:[%s417 + $0x2] sm:$0xff]
        %v495 = vld [vmem:[%s417 + $0xa] sm:$0xff]
        %s496 = scalar_lea.vmem %s1, 8
        %v497 = vld [vmem:[%s496] sm:$0xf]
        %v499 = vsel %vm225, %v494, 0
        %v502 = vsel %vm225, %v495, 0
        %v505 = vsel %vm427, %v497, 0
        %507 = vmatpush.msra.mxu0 0.0
        %508 = vmatpush.msra.mxu0 0.0
        %509 = vmatpush.msra.mxu0 0.0
        %510 = vmatpush.msra.mxu0 0.0
        %511 = vmatpush.msra.mxu0 0.0
        %512 = vmatpush.msra.mxu0 0.0
        %513 = vmatpush.msra.mxu0 0.0
        %514 = vmatpush.msra.mxu0 0.0
        %515 = vmatpush.msra.mxu0 0.0
        %516 = vmatpush.msra.mxu0 0.0
        %517 = vmatpush.msra.mxu0 0.0
        %518 = vmatpush.msra.mxu0 0.0
        %519 = vmatpush.msra.mxu0 0.0
        %520 = vmatpush.msra.mxu0 0.0
        %521 = vmatpush.msra.mxu0 0.0
        %522 = vmatpush.msra.mxu0 %v505
        %523 = vmatmul.f32.gmra.mxu0 %v499
        %v524 = vpop.f32.mrf.mxu0
        %v525 = vadd.f32 0.0, %v524
        %526 = vmatmul.f32.gmra.mxu0 %v502
        %v527 = vpop.f32.mrf.mxu0
        %v528 = vadd.f32 0.0, %v527
        %529 = vdwg.mxu0
        %v530 = vadd.f32 %v492, %v525
        %v531 = vadd.f32 %v493, %v528
        %s532 = sadd.s32 %s411, 1
        %s533 = smul.u32 %s532, 24
        %s534 = scalar_lea.vmem [#allocation2], %s533
        %v535 = vld [vmem:[%s534] sm:$0xff]
        %v536 = vld [vmem:[%s534 + $0x8] sm:$0xff]
        %s537 = scalar_lea.vmem %s1, 12
        %v538 = vld [vmem:[%s537] sm:$0xf]
        %v540 = vsel %vm225, %v535, 0
        %v543 = vsel %vm225, %v536, 0
        %v546 = vsel %vm427, %v538, 0
        %548 = vmatpush.msra.mxu0 0.0
        %549 = vmatpush.msra.mxu0 0.0
        %550 = vmatpush.msra.mxu0 0.0
        %551 = vmatpush.msra.mxu0 0.0
        %552 = vmatpush.msra.mxu0 0.0
        %553 = vmatpush.msra.mxu0 0.0
        %554 = vmatpush.msra.mxu0 0.0
        %555 = vmatpush.msra.mxu0 0.0
        %556 = vmatpush.msra.mxu0 0.0
        %557 = vmatpush.msra.mxu0 0.0
        %558 = vmatpush.msra.mxu0 0.0
        %559 = vmatpush.msra.mxu0 0.0
        %560 = vmatpush.msra.mxu0 0.0
        %561 = vmatpush.msra.mxu0 0.0
        %562 = vmatpush.msra.mxu0 0.0
        %563 = vmatpush.msra.mxu0 %v546
        %564 = vmatmul.f32.gmra.mxu0 %v540
        %v565 = vpop.f32.mrf.mxu0
        %v566 = vadd.f32 0.0, %v565
        %567 = vmatmul.f32.gmra.mxu0 %v543
        %v568 = vpop.f32.mrf.mxu0
        %v569 = vadd.f32 0.0, %v568
        %570 = vdwg.mxu0
        %v571 = vadd.f32 %v530, %v566
        %v572 = vadd.f32 %v531, %v569
        %v573 = vld [vmem:[%s534 + $0x1] sm:$0xff]
        %v574 = vld [vmem:[%s534 + $0x9] sm:$0xff]
        %s575 = scalar_lea.vmem %s1, 16
        %v576 = vld [vmem:[%s575] sm:$0xf]
        %v578 = vsel %vm225, %v573, 0
        %v581 = vsel %vm225, %v574, 0
        %v584 = vsel %vm427, %v576, 0
        %586 = vmatpush.msra.mxu0 0.0
        %587 = vmatpush.msra.mxu0 0.0
        %588 = vmatpush.msra.mxu0 0.0
        %589 = vmatpush.msra.mxu0 0.0
        %590 = vmatpush.msra.mxu0 0.0
        %591 = vmatpush.msra.mxu0 0.0
        %592 = vmatpush.msra.mxu0 0.0
        %593 = vmatpush.msra.mxu0 0.0
        %594 = vmatpush.msra.mxu0 0.0
        %595 = vmatpush.msra.mxu0 0.0
        %596 = vmatpush.msra.mxu0 0.0
        %597 = vmatpush.msra.mxu0 0.0
        %598 = vmatpush.msra.mxu0 0.0
        %599 = vmatpush.msra.mxu0 0.0
        %600 = vmatpush.msra.mxu0 0.0
        %601 = vmatpush.msra.mxu0 %v584
        %602 = vmatmul.f32.gmra.mxu0 %v578
        %v603 = vpop.f32.mrf.mxu0
        %v604 = vadd.f32 0.0, %v603
        %605 = vmatmul.f32.gmra.mxu0 %v581
        %v606 = vpop.f32.mrf.mxu0
        %v607 = vadd.f32 0.0, %v606
        %608 = vdwg.mxu0
        %v609 = vadd.f32 %v571, %v604
        %v610 = vadd.f32 %v572, %v607
        %v611 = vld [vmem:[%s534 + $0x2] sm:$0xff]
        %v612 = vld [vmem:[%s534 + $0xa] sm:$0xff]
        %s613 = scalar_lea.vmem %s1, 20
        %v614 = vld [vmem:[%s613] sm:$0xf]
        %v616 = vsel %vm225, %v611, 0
        %v619 = vsel %vm225, %v612, 0
        %v622 = vsel %vm427, %v614, 0
        %624 = vmatpush.msra.mxu0 0.0
        %625 = vmatpush.msra.mxu0 0.0
        %626 = vmatpush.msra.mxu0 0.0
        %627 = vmatpush.msra.mxu0 0.0
        %628 = vmatpush.msra.mxu0 0.0
        %629 = vmatpush.msra.mxu0 0.0
        %630 = vmatpush.msra.mxu0 0.0
        %631 = vmatpush.msra.mxu0 0.0
        %632 = vmatpush.msra.mxu0 0.0
        %633 = vmatpush.msra.mxu0 0.0
        %634 = vmatpush.msra.mxu0 0.0
        %635 = vmatpush.msra.mxu0 0.0
        %636 = vmatpush.msra.mxu0 0.0
        %637 = vmatpush.msra.mxu0 0.0
        %638 = vmatpush.msra.mxu0 0.0
        %639 = vmatpush.msra.mxu0 %v622
        %640 = vmatmul.f32.gmra.mxu0 %v616
        %v641 = vpop.f32.mrf.mxu0
        %v642 = vadd.f32 0.0, %v641
        %643 = vmatmul.f32.gmra.mxu0 %v619
        %v644 = vpop.f32.mrf.mxu0
        %v645 = vadd.f32 0.0, %v644
        %646 = vdwg.mxu0
        %v647 = vadd.f32 %v609, %v642
        %v648 = vadd.f32 %v610, %v645
        %s649 = sadd.s32 %s411, 2
        %s650 = smul.u32 %s649, 24
        %s651 = scalar_lea.vmem [#allocation2], %s650
        %v652 = vld [vmem:[%s651] sm:$0xff]
        %v653 = vld [vmem:[%s651 + $0x8] sm:$0xff]
        %s654 = scalar_lea.vmem %s1, 24
        %v655 = vld [vmem:[%s654] sm:$0xf]
        %v657 = vsel %vm225, %v652, 0
        %v660 = vsel %vm225, %v653, 0
        %v663 = vsel %vm427, %v655, 0
        %665 = vmatpush.msra.mxu0 0.0
        %666 = vmatpush.msra.mxu0 0.0
        %667 = vmatpush.msra.mxu0 0.0
        %668 = vmatpush.msra.mxu0 0.0
        %669 = vmatpush.msra.mxu0 0.0
        %670 = vmatpush.msra.mxu0 0.0
        %671 = vmatpush.msra.mxu0 0.0
        %672 = vmatpush.msra.mxu0 0.0
        %673 = vmatpush.msra.mxu0 0.0
        %674 = vmatpush.msra.mxu0 0.0
        %675 = vmatpush.msra.mxu0 0.0
        %676 = vmatpush.msra.mxu0 0.0
        %677 = vmatpush.msra.mxu0 0.0
        %678 = vmatpush.msra.mxu0 0.0
        %679 = vmatpush.msra.mxu0 0.0
        %680 = vmatpush.msra.mxu0 %v663
        %681 = vmatmul.f32.gmra.mxu0 %v657
        %v682 = vpop.f32.mrf.mxu0
        %v683 = vadd.f32 0.0, %v682
        %684 = vmatmul.f32.gmra.mxu0 %v660
        %v685 = vpop.f32.mrf.mxu0
        %v686 = vadd.f32 0.0, %v685
        %687 = vdwg.mxu0
        %v688 = vadd.f32 %v647, %v683
        %v689 = vadd.f32 %v648, %v686
        %v690 = vld [vmem:[%s651 + $0x1] sm:$0xff]
        %v691 = vld [vmem:[%s651 + $0x9] sm:$0xff]
        %s692 = scalar_lea.vmem %s1, 28
        %v693 = vld [vmem:[%s692] sm:$0xf]
        %v695 = vsel %vm225, %v690, 0
        %v698 = vsel %vm225, %v691, 0
        %v701 = vsel %vm427, %v693, 0
        %703 = vmatpush.msra.mxu0 0.0
        %704 = vmatpush.msra.mxu0 0.0
        %705 = vmatpush.msra.mxu0 0.0
        %706 = vmatpush.msra.mxu0 0.0
        %707 = vmatpush.msra.mxu0 0.0
        %708 = vmatpush.msra.mxu0 0.0
        %709 = vmatpush.msra.mxu0 0.0
        %710 = vmatpush.msra.mxu0 0.0
        %711 = vmatpush.msra.mxu0 0.0
        %712 = vmatpush.msra.mxu0 0.0
        %713 = vmatpush.msra.mxu0 0.0
        %714 = vmatpush.msra.mxu0 0.0
        %715 = vmatpush.msra.mxu0 0.0
        %716 = vmatpush.msra.mxu0 0.0
        %717 = vmatpush.msra.mxu0 0.0
        %718 = vmatpush.msra.mxu0 %v701
        %719 = vmatmul.f32.gmra.mxu0 %v695
        %v720 = vpop.f32.mrf.mxu0
        %v721 = vadd.f32 0.0, %v720
        %722 = vmatmul.f32.gmra.mxu0 %v698
        %v723 = vpop.f32.mrf.mxu0
        %v724 = vadd.f32 0.0, %v723
        %725 = vdwg.mxu0
        %v726 = vadd.f32 %v688, %v721
        %v727 = vadd.f32 %v689, %v724
        %v728 = vld [vmem:[%s651 + $0x2] sm:$0xff]
        %v729 = vld [vmem:[%s651 + $0xa] sm:$0xff]
        %s730 = scalar_lea.vmem %s1, 32
        %v731 = vld [vmem:[%s730] sm:$0xf]
        %v733 = vsel %vm225, %v728, 0
        %v736 = vsel %vm225, %v729, 0
        %v739 = vsel %vm427, %v731, 0
        %741 = vmatpush.msra.mxu0 0.0
        %742 = vmatpush.msra.mxu0 0.0
        %743 = vmatpush.msra.mxu0 0.0
        %744 = vmatpush.msra.mxu0 0.0
        %745 = vmatpush.msra.mxu0 0.0
        %746 = vmatpush.msra.mxu0 0.0
        %747 = vmatpush.msra.mxu0 0.0
        %748 = vmatpush.msra.mxu0 0.0
        %749 = vmatpush.msra.mxu0 0.0
        %750 = vmatpush.msra.mxu0 0.0
        %751 = vmatpush.msra.mxu0 0.0
        %752 = vmatpush.msra.mxu0 0.0
        %753 = vmatpush.msra.mxu0 0.0
        %754 = vmatpush.msra.mxu0 0.0
        %755 = vmatpush.msra.mxu0 0.0
        %756 = vmatpush.msra.mxu0 %v739
        %757 = vmatmul.f32.gmra.mxu0 %v733
        %v758 = vpop.f32.mrf.mxu0
        %v759 = vadd.f32 0.0, %v758
        %760 = vmatmul.f32.gmra.mxu0 %v736
        %v761 = vpop.f32.mrf.mxu0
        %v762 = vadd.f32 0.0, %v761
        %763 = vdwg.mxu0
        %v764 = vadd.f32 %v726, %v759
        %v765 = vadd.f32 %v727, %v762
        %v766 = vmax.f32 %v764, 0.0
        %v767 = vmax.f32 %v765, 0.0
        %s768 = scalar_lea.vmem [#allocation3], %s533
        %769 = vst.msk [vmem:[%s768 + $0x1] sm:$0xff] %vm281, %v766
        %770 = vst.msk [vmem:[%s768 + $0x9] sm:$0xff] %vm281, %v767
      $region45: #{decoder_block_resnet.1} parent=39 // loop_footer
        %s415 = sadd.s32 1, %s411
      $region46: #{decoder_block_resnet.1} parent=39 // loop_footer_branch
        %410 = sbr.rel target = $region42
      $region47: #{decoder_block_resnet.1} parent=39 // loop_exit
        _
      loop: start=0, step=1, limit=16
      $region48: #{decoder_block_resnet.1} parent=39 // loop_pre_header
        _
      $region49: #{decoder_block_resnet.1} parent=39 // loop_header
        %s772 = sphi 0, %s776
        %p773 = scmp.ge.s32.totalorder %s772, 16
      $region50: #{decoder_block_resnet.1} parent=39 // loop_header_branch
        %775 = sbr.rel (%p773) target = $region54
      $region51: #{decoder_block_resnet.1} parent=39 // loop_body
        %s777 = smul.u32 %s772, 24
        %s778 = scalar_lea.vmem [#allocation3], %s777
        %v779 = vld [vmem:[%s778] sm:$0xff]
        %v780 = vld [vmem:[%s778 + $0x8] sm:$0xff]
        %v781 = vld [vmem:[%s778 + $0x1] sm:$0xff]
        %v782 = vld [vmem:[%s778 + $0x9] sm:$0xff]
        %v783 = vld [vmem:[%s778 + $0x2] sm:$0xff]
        %v784 = vld [vmem:[%s778 + $0xa] sm:$0xff]
        %s785 = sadd.s32 %s772, 1
        %s786 = smul.u32 %s785, 24
        %s787 = scalar_lea.vmem [#allocation3], %s786
        %v788 = vld [vmem:[%s787] sm:$0xff]
        %v789 = vld [vmem:[%s787 + $0x8] sm:$0xff]
        %v790 = vld [vmem:[%s787 + $0x1] sm:$0xff]
        %v791 = vld [vmem:[%s787 + $0x9] sm:$0xff]
        %v792 = vld [vmem:[%s787 + $0x2] sm:$0xff]
        %v793 = vld [vmem:[%s787 + $0xa] sm:$0xff]
        %s794 = sadd.s32 %s772, 2
        %s795 = smul.u32 %s794, 24
        %s796 = scalar_lea.vmem [#allocation3], %s795
        %v797 = vld [vmem:[%s796] sm:$0xff]
        %v798 = vld [vmem:[%s796 + $0x8] sm:$0xff]
        %v799 = vld [vmem:[%s796 + $0x1] sm:$0xff]
        %v800 = vld [vmem:[%s796 + $0x9] sm:$0xff]
        %v801 = vld [vmem:[%s796 + $0x2] sm:$0xff]
        %v802 = vld [vmem:[%s796 + $0xa] sm:$0xff]
        %s803 = scalar_lea.vmem %s3, 40
        %v804 = vld [vmem:[%s803] sm:$0xff]
        %v806 = vsel %vm281, %v790, 0
        %v809 = vsel %vm281, %v791, 0
        %811 = vmatpush.msra.mxu0 0.0
        %812 = vmatpush.msra.mxu0 0.0
        %813 = vmatpush.msra.mxu0 0.0
        %814 = vmatpush.msra.mxu0 0.0
        %815 = vmatpush.msra.mxu0 0.0
        %816 = vmatpush.msra.mxu0 0.0
        %817 = vmatpush.msra.mxu0 0.0
        %818 = vmatpush.msra.mxu0 0.0
        %819 = vmatpush.msra.mxu0 0.0
        %820 = vmatpush.msra.mxu0 0.0
        %821 = vmatpush.msra.mxu0 0.0
        %822 = vmatpush.msra.mxu0 0.0
        %823 = vmatpush.msra.mxu0 0.0
        %824 = vmatpush.msra.mxu0 0.0
        %825 = vmatpush.msra.mxu0 0.0
        %826 = vmatpush.msra.mxu0 %v804
        %827 = vmatmul.f32.gmra.mxu0 %v806
        %v828 = vpop.f32.mrf.mxu0
        %v829 = vadd.f32 0.0, %v828
        %830 = vmatmul.f32.gmra.mxu0 %v809
        %v831 = vpop.f32.mrf.mxu0
        %v832 = vadd.f32 0.0, %v831
        %833 = vdwg.mxu0
        %v834 = vadd.f32 %v408, %v829
        %v835 = vadd.f32 %v408, %v832
        %s836 = scalar_lea.vmem %s3, 56
        %v837 = vld [vmem:[%s836] sm:$0xff]
        %v839 = vsel %vm281, %v788, 0
        %v842 = vsel %vm281, %v789, 0
        %844 = vmatpush.msra.mxu0 0.0
        %845 = vmatpush.msra.mxu0 0.0
        %846 = vmatpush.msra.mxu0 0.0
        %847 = vmatpush.msra.mxu0 0.0
        %848 = vmatpush.msra.mxu0 0.0
        %849 = vmatpush.msra.mxu0 0.0
        %850 = vmatpush.msra.mxu0 0.0
        %851 = vmatpush.msra.mxu0 0.0
        %852 = vmatpush.msra.mxu0 0.0
        %853 = vmatpush.msra.mxu0 0.0
        %854 = vmatpush.msra.mxu0 0.0
        %855 = vmatpush.msra.mxu0 0.0
        %856 = vmatpush.msra.mxu0 0.0
        %857 = vmatpush.msra.mxu0 0.0
        %858 = vmatpush.msra.mxu0 0.0
        %859 = vmatpush.msra.mxu0 %v837
        %860 = vmatmul.f32.gmra.mxu0 %v839
        %v861 = vpop.f32.mrf.mxu0
        %v862 = vadd.f32 0.0, %v861
        %863 = vmatmul.f32.gmra.mxu0 %v842
        %v864 = vpop.f32.mrf.mxu0
        %v865 = vadd.f32 0.0, %v864
        %866 = vdwg.mxu0
        %v867 = vadd.f32 %v834, %v862
        %v868 = vadd.f32 %v835, %v865
        %s869 = scalar_lea.vmem %s3, 104
        %v870 = vld [vmem:[%s869] sm:$0xff]
        %v872 = vsel %vm281, %v781, 0
        %v875 = vsel %vm281, %v782, 0
        %877 = vmatpush.msra.mxu0 0.0
        %878 = vmatpush.msra.mxu0 0.0
        %879 = vmatpush.msra.mxu0 0.0
        %880 = vmatpush.msra.mxu0 0.0
        %881 = vmatpush.msra.mxu0 0.0
        %882 = vmatpush.msra.mxu0 0.0
        %883 = vmatpush.msra.mxu0 0.0
        %884 = vmatpush.msra.mxu0 0.0
        %885 = vmatpush.msra.mxu0 0.0
        %886 = vmatpush.msra.mxu0 0.0
        %887 = vmatpush.msra.mxu0 0.0
        %888 = vmatpush.msra.mxu0 0.0
        %889 = vmatpush.msra.mxu0 0.0
        %890 = vmatpush.msra.mxu0 0.0
        %891 = vmatpush.msra.mxu0 0.0
        %892 = vmatpush.msra.mxu0 %v870
        %893 = vmatmul.f32.gmra.mxu0 %v872
        %v894 = vpop.f32.mrf.mxu0
        %v895 = vadd.f32 0.0, %v894
        %896 = vmatmul.f32.gmra.mxu0 %v875
        %v897 = vpop.f32.mrf.mxu0
        %v898 = vadd.f32 0.0, %v897
        %899 = vdwg.mxu0
        %v900 = vadd.f32 %v867, %v895
        %v901 = vadd.f32 %v868, %v898
        %s902 = scalar_lea.vmem %s3, 120
        %v903 = vld [vmem:[%s902] sm:$0xff]
        %v905 = vsel %vm281, %v779, 0
        %v908 = vsel %vm281, %v780, 0
        %910 = vmatpush.msra.mxu0 0.0
        %911 = vmatpush.msra.mxu0 0.0
        %912 = vmatpush.msra.mxu0 0.0
        %913 = vmatpush.msra.mxu0 0.0
        %914 = vmatpush.msra.mxu0 0.0
        %915 = vmatpush.msra.mxu0 0.0
        %916 = vmatpush.msra.mxu0 0.0
        %917 = vmatpush.msra.mxu0 0.0
        %918 = vmatpush.msra.mxu0 0.0
        %919 = vmatpush.msra.mxu0 0.0
        %920 = vmatpush.msra.mxu0 0.0
        %921 = vmatpush.msra.mxu0 0.0
        %922 = vmatpush.msra.mxu0 0.0
        %923 = vmatpush.msra.mxu0 0.0
        %924 = vmatpush.msra.mxu0 0.0
        %925 = vmatpush.msra.mxu0 %v903
        %926 = vmatmul.f32.gmra.mxu0 %v905
        %v927 = vpop.f32.mrf.mxu0
        %v928 = vadd.f32 0.0, %v927
        %929 = vmatmul.f32.gmra.mxu0 %v908
        %v930 = vpop.f32.mrf.mxu0
        %v931 = vadd.f32 0.0, %v930
        %932 = vdwg.mxu0
        %v933 = vadd.f32 %v900, %v928
        %v934 = vadd.f32 %v901, %v931
        %v935 = vmax.f32 %v933, 0.0
        %v936 = vmax.f32 %v934, 0.0
        %s937 = smul.u32 %s772, 16
        %s938 = scalar_lea.vmem %s224, %s937
        %939 = vst.msk [vmem:[%s938] sm:$0xff] %vm225, %v935
        %940 = vst.msk [vmem:[%s938 + $0x8] sm:$0xff] %vm225, %v936
        %s941 = scalar_lea.vmem %s3, 32
        %v942 = vld [vmem:[%s941] sm:$0xff]
        %v944 = vsel %vm281, %v792, 0
        %v947 = vsel %vm281, %v793, 0
        %949 = vmatpush.msra.mxu0 0.0
        %950 = vmatpush.msra.mxu0 0.0
        %951 = vmatpush.msra.mxu0 0.0
        %952 = vmatpush.msra.mxu0 0.0
        %953 = vmatpush.msra.mxu0 0.0
        %954 = vmatpush.msra.mxu0 0.0
        %955 = vmatpush.msra.mxu0 0.0
        %956 = vmatpush.msra.mxu0 0.0
        %957 = vmatpush.msra.mxu0 0.0
        %958 = vmatpush.msra.mxu0 0.0
        %959 = vmatpush.msra.mxu0 0.0
        %960 = vmatpush.msra.mxu0 0.0
        %961 = vmatpush.msra.mxu0 0.0
        %962 = vmatpush.msra.mxu0 0.0
        %963 = vmatpush.msra.mxu0 0.0
        %964 = vmatpush.msra.mxu0 %v942
        %965 = vmatmul.f32.gmra.mxu0 %v944
        %v966 = vpop.f32.mrf.mxu0
        %v967 = vadd.f32 0.0, %v966
        %968 = vmatmul.f32.gmra.mxu0 %v947
        %v969 = vpop.f32.mrf.mxu0
        %v970 = vadd.f32 0.0, %v969
        %971 = vdwg.mxu0
        %v972 = vadd.f32 %v408, %v967
        %v973 = vadd.f32 %v408, %v970
        %s974 = scalar_lea.vmem %s3, 48
        %v975 = vld [vmem:[%s974] sm:$0xff]
        %976 = vmatpush.msra.mxu0 0.0
        %977 = vmatpush.msra.mxu0 0.0
        %978 = vmatpush.msra.mxu0 0.0
        %979 = vmatpush.msra.mxu0 0.0
        %980 = vmatpush.msra.mxu0 0.0
        %981 = vmatpush.msra.mxu0 0.0
        %982 = vmatpush.msra.mxu0 0.0
        %983 = vmatpush.msra.mxu0 0.0
        %984 = vmatpush.msra.mxu0 0.0
        %985 = vmatpush.msra.mxu0 0.0
        %986 = vmatpush.msra.mxu0 0.0
        %987 = vmatpush.msra.mxu0 0.0
        %988 = vmatpush.msra.mxu0 0.0
        %989 = vmatpush.msra.mxu0 0.0
        %990 = vmatpush.msra.mxu0 0.0
        %991 = vmatpush.msra.mxu0 %v975
        %992 = vmatmul.f32.gmra.mxu0 %v806
        %v993 = vpop.f32.mrf.mxu0
        %v994 = vadd.f32 0.0, %v993
        %995 = vmatmul.f32.gmra.mxu0 %v809
        %v996 = vpop.f32.mrf.mxu0
        %v997 = vadd.f32 0.0, %v996
        %998 = vdwg.mxu0
        %v999 = vadd.f32 %v972, %v994
        %v1000 = vadd.f32 %v973, %v997
        %s1001 = scalar_lea.vmem %s3, 96
        %v1002 = vld [vmem:[%s1001] sm:$0xff]
        %v1004 = vsel %vm281, %v783, 0
        %v1007 = vsel %vm281, %v784, 0
        %1009 = vmatpush.msra.mxu0 0.0
        %1010 = vmatpush.msra.mxu0 0.0
        %1011 = vmatpush.msra.mxu0 0.0
        %1012 = vmatpush.msra.mxu0 0.0
        %1013 = vmatpush.msra.mxu0 0.0
        %1014 = vmatpush.msra.mxu0 0.0
        %1015 = vmatpush.msra.mxu0 0.0
        %1016 = vmatpush.msra.mxu0 0.0
        %1017 = vmatpush.msra.mxu0 0.0
        %1018 = vmatpush.msra.mxu0 0.0
        %1019 = vmatpush.msra.mxu0 0.0
        %1020 = vmatpush.msra.mxu0 0.0
        %1021 = vmatpush.msra.mxu0 0.0
        %1022 = vmatpush.msra.mxu0 0.0
        %1023 = vmatpush.msra.mxu0 0.0
        %1024 = vmatpush.msra.mxu0 %v1002
        %1025 = vmatmul.f32.gmra.mxu0 %v1004
        %v1026 = vpop.f32.mrf.mxu0
        %v1027 = vadd.f32 0.0, %v1026
        %1028 = vmatmul.f32.gmra.mxu0 %v1007
        %v1029 = vpop.f32.mrf.mxu0
        %v1030 = vadd.f32 0.0, %v1029
        %1031 = vdwg.mxu0
        %v1032 = vadd.f32 %v999, %v1027
        %v1033 = vadd.f32 %v1000, %v1030
        %s1034 = scalar_lea.vmem %s3, 112
        %v1035 = vld [vmem:[%s1034] sm:$0xff]
        %1036 = vmatpush.msra.mxu0 0.0
        %1037 = vmatpush.msra.mxu0 0.0
        %1038 = vmatpush.msra.mxu0 0.0
        %1039 = vmatpush.msra.mxu0 0.0
        %1040 = vmatpush.msra.mxu0 0.0
        %1041 = vmatpush.msra.mxu0 0.0
        %1042 = vmatpush.msra.mxu0 0.0
        %1043 = vmatpush.msra.mxu0 0.0
        %1044 = vmatpush.msra.mxu0 0.0
        %1045 = vmatpush.msra.mxu0 0.0
        %1046 = vmatpush.msra.mxu0 0.0
        %1047 = vmatpush.msra.mxu0 0.0
        %1048 = vmatpush.msra.mxu0 0.0
        %1049 = vmatpush.msra.mxu0 0.0
        %1050 = vmatpush.msra.mxu0 0.0
        %1051 = vmatpush.msra.mxu0 %v1035
        %1052 = vmatmul.f32.gmra.mxu0 %v872
        %v1053 = vpop.f32.mrf.mxu0
        %v1054 = vadd.f32 0.0, %v1053
        %1055 = vmatmul.f32.gmra.mxu0 %v875
        %v1056 = vpop.f32.mrf.mxu0
        %v1057 = vadd.f32 0.0, %v1056
        %1058 = vdwg.mxu0
        %v1059 = vadd.f32 %v1032, %v1054
        %v1060 = vadd.f32 %v1033, %v1057
        %v1061 = vmax.f32 %v1059, 0.0
        %v1062 = vmax.f32 %v1060, 0.0
        %s1063 = sadd.s32 %s937, 256
        %s1064 = scalar_lea.vmem %s224, %s1063
        %1065 = vst.msk [vmem:[%s1064] sm:$0xff] %vm225, %v1061
        %1066 = vst.msk [vmem:[%s1064 + $0x8] sm:$0xff] %vm225, %v1062
        %s1067 = scalar_lea.vmem %s3, 8
        %v1068 = vld [vmem:[%s1067] sm:$0xff]
        %v1070 = vsel %vm281, %v799, 0
        %v1073 = vsel %vm281, %v800, 0
        %1075 = vmatpush.msra.mxu0 0.0
        %1076 = vmatpush.msra.mxu0 0.0
        %1077 = vmatpush.msra.mxu0 0.0
        %1078 = vmatpush.msra.mxu0 0.0
        %1079 = vmatpush.msra.mxu0 0.0
        %1080 = vmatpush.msra.mxu0 0.0
        %1081 = vmatpush.msra.mxu0 0.0
        %1082 = vmatpush.msra.mxu0 0.0
        %1083 = vmatpush.msra.mxu0 0.0
        %1084 = vmatpush.msra.mxu0 0.0
        %1085 = vmatpush.msra.mxu0 0.0
        %1086 = vmatpush.msra.mxu0 0.0
        %1087 = vmatpush.msra.mxu0 0.0
        %1088 = vmatpush.msra.mxu0 0.0
        %1089 = vmatpush.msra.mxu0 0.0
        %1090 = vmatpush.msra.mxu0 %v1068
        %1091 = vmatmul.f32.gmra.mxu0 %v1070
        %v1092 = vpop.f32.mrf.mxu0
        %v1093 = vadd.f32 0.0, %v1092
        %1094 = vmatmul.f32.gmra.mxu0 %v1073
        %v1095 = vpop.f32.mrf.mxu0
        %v1096 = vadd.f32 0.0, %v1095
        %1097 = vdwg.mxu0
        %v1098 = vadd.f32 %v408, %v1093
        %v1099 = vadd.f32 %v408, %v1096
        %s1100 = scalar_lea.vmem %s3, 24
        %v1101 = vld [vmem:[%s1100] sm:$0xff]
        %v1103 = vsel %vm281, %v797, 0
        %v1106 = vsel %vm281, %v798, 0
        %1108 = vmatpush.msra.mxu0 0.0
        %1109 = vmatpush.msra.mxu0 0.0
        %1110 = vmatpush.msra.mxu0 0.0
        %1111 = vmatpush.msra.mxu0 0.0
        %1112 = vmatpush.msra.mxu0 0.0
        %1113 = vmatpush.msra.mxu0 0.0
        %1114 = vmatpush.msra.mxu0 0.0
        %1115 = vmatpush.msra.mxu0 0.0
        %1116 = vmatpush.msra.mxu0 0.0
        %1117 = vmatpush.msra.mxu0 0.0
        %1118 = vmatpush.msra.mxu0 0.0
        %1119 = vmatpush.msra.mxu0 0.0
        %1120 = vmatpush.msra.mxu0 0.0
        %1121 = vmatpush.msra.mxu0 0.0
        %1122 = vmatpush.msra.mxu0 0.0
        %1123 = vmatpush.msra.mxu0 %v1101
        %1124 = vmatmul.f32.gmra.mxu0 %v1103
        %v1125 = vpop.f32.mrf.mxu0
        %v1126 = vadd.f32 0.0, %v1125
        %1127 = vmatmul.f32.gmra.mxu0 %v1106
        %v1128 = vpop.f32.mrf.mxu0
        %v1129 = vadd.f32 0.0, %v1128
        %1130 = vdwg.mxu0
        %v1131 = vadd.f32 %v1098, %v1126
        %v1132 = vadd.f32 %v1099, %v1129
        %s1133 = scalar_lea.vmem %s3, 72
        %v1134 = vld [vmem:[%s1133] sm:$0xff]
        %1135 = vmatpush.msra.mxu0 0.0
        %1136 = vmatpush.msra.mxu0 0.0
        %1137 = vmatpush.msra.mxu0 0.0
        %1138 = vmatpush.msra.mxu0 0.0
        %1139 = vmatpush.msra.mxu0 0.0
        %1140 = vmatpush.msra.mxu0 0.0
        %1141 = vmatpush.msra.mxu0 0.0
        %1142 = vmatpush.msra.mxu0 0.0
        %1143 = vmatpush.msra.mxu0 0.0
        %1144 = vmatpush.msra.mxu0 0.0
        %1145 = vmatpush.msra.mxu0 0.0
        %1146 = vmatpush.msra.mxu0 0.0
        %1147 = vmatpush.msra.mxu0 0.0
        %1148 = vmatpush.msra.mxu0 0.0
        %1149 = vmatpush.msra.mxu0 0.0
        %1150 = vmatpush.msra.mxu0 %v1134
        %1151 = vmatmul.f32.gmra.mxu0 %v806
        %v1152 = vpop.f32.mrf.mxu0
        %v1153 = vadd.f32 0.0, %v1152
        %1154 = vmatmul.f32.gmra.mxu0 %v809
        %v1155 = vpop.f32.mrf.mxu0
        %v1156 = vadd.f32 0.0, %v1155
        %1157 = vdwg.mxu0
        %v1158 = vadd.f32 %v1131, %v1153
        %v1159 = vadd.f32 %v1132, %v1156
        %s1160 = scalar_lea.vmem %s3, 88
        %v1161 = vld [vmem:[%s1160] sm:$0xff]
        %1162 = vmatpush.msra.mxu0 0.0
        %1163 = vmatpush.msra.mxu0 0.0
        %1164 = vmatpush.msra.mxu0 0.0
        %1165 = vmatpush.msra.mxu0 0.0
        %1166 = vmatpush.msra.mxu0 0.0
        %1167 = vmatpush.msra.mxu0 0.0
        %1168 = vmatpush.msra.mxu0 0.0
        %1169 = vmatpush.msra.mxu0 0.0
        %1170 = vmatpush.msra.mxu0 0.0
        %1171 = vmatpush.msra.mxu0 0.0
        %1172 = vmatpush.msra.mxu0 0.0
        %1173 = vmatpush.msra.mxu0 0.0
        %1174 = vmatpush.msra.mxu0 0.0
        %1175 = vmatpush.msra.mxu0 0.0
        %1176 = vmatpush.msra.mxu0 0.0
        %1177 = vmatpush.msra.mxu0 %v1161
        %1178 = vmatmul.f32.gmra.mxu0 %v839
        %v1179 = vpop.f32.mrf.mxu0
        %v1180 = vadd.f32 0.0, %v1179
        %1181 = vmatmul.f32.gmra.mxu0 %v842
        %v1182 = vpop.f32.mrf.mxu0
        %v1183 = vadd.f32 0.0, %v1182
        %1184 = vdwg.mxu0
        %v1185 = vadd.f32 %v1158, %v1180
        %v1186 = vadd.f32 %v1159, %v1183
        %v1187 = vmax.f32 %v1185, 0.0
        %v1188 = vmax.f32 %v1186, 0.0
        %s1189 = sadd.s32 %s937, 512
        %s1190 = scalar_lea.vmem %s224, %s1189
        %1191 = vst.msk [vmem:[%s1190] sm:$0xff] %vm225, %v1187
        %1192 = vst.msk [vmem:[%s1190 + $0x8] sm:$0xff] %vm225, %v1188
        %v1193 = vld [vmem:[%s3] sm:$0xff]
        %v1195 = vsel %vm281, %v801, 0
        %v1198 = vsel %vm281, %v802, 0
        %1200 = vmatpush.msra.mxu0 0.0
        %1201 = vmatpush.msra.mxu0 0.0
        %1202 = vmatpush.msra.mxu0 0.0
        %1203 = vmatpush.msra.mxu0 0.0
        %1204 = vmatpush.msra.mxu0 0.0
        %1205 = vmatpush.msra.mxu0 0.0
        %1206 = vmatpush.msra.mxu0 0.0
        %1207 = vmatpush.msra.mxu0 0.0
        %1208 = vmatpush.msra.mxu0 0.0
        %1209 = vmatpush.msra.mxu0 0.0
        %1210 = vmatpush.msra.mxu0 0.0
        %1211 = vmatpush.msra.mxu0 0.0
        %1212 = vmatpush.msra.mxu0 0.0
        %1213 = vmatpush.msra.mxu0 0.0
        %1214 = vmatpush.msra.mxu0 0.0
        %1215 = vmatpush.msra.mxu0 %v1193
        %1216 = vmatmul.f32.gmra.mxu0 %v1195
        %v1217 = vpop.f32.mrf.mxu0
        %v1218 = vadd.f32 0.0, %v1217
        %1219 = vmatmul.f32.gmra.mxu0 %v1198
        %v1220 = vpop.f32.mrf.mxu0
        %v1221 = vadd.f32 0.0, %v1220
        %1222 = vdwg.mxu0
        %v1223 = vadd.f32 %v408, %v1218
        %v1224 = vadd.f32 %v408, %v1221
        %s1225 = scalar_lea.vmem %s3, 16
        %v1226 = vld [vmem:[%s1225] sm:$0xff]
        %1227 = vmatpush.msra.mxu0 0.0
        %1228 = vmatpush.msra.mxu0 0.0
        %1229 = vmatpush.msra.mxu0 0.0
        %1230 = vmatpush.msra.mxu0 0.0
        %1231 = vmatpush.msra.mxu0 0.0
        %1232 = vmatpush.msra.mxu0 0.0
        %1233 = vmatpush.msra.mxu0 0.0
        %1234 = vmatpush.msra.mxu0 0.0
        %1235 = vmatpush.msra.mxu0 0.0
        %1236 = vmatpush.msra.mxu0 0.0
        %1237 = vmatpush.msra.mxu0 0.0
        %1238 = vmatpush.msra.mxu0 0.0
        %1239 = vmatpush.msra.mxu0 0.0
        %1240 = vmatpush.msra.mxu0 0.0
        %1241 = vmatpush.msra.mxu0 0.0
        %1242 = vmatpush.msra.mxu0 %v1226
        %1243 = vmatmul.f32.gmra.mxu0 %v1070
        %v1244 = vpop.f32.mrf.mxu0
        %v1245 = vadd.f32 0.0, %v1244
        %1246 = vmatmul.f32.gmra.mxu0 %v1073
        %v1247 = vpop.f32.mrf.mxu0
        %v1248 = vadd.f32 0.0, %v1247
        %1249 = vdwg.mxu0
        %v1250 = vadd.f32 %v1223, %v1245
        %v1251 = vadd.f32 %v1224, %v1248
        %s1252 = scalar_lea.vmem %s3, 64
        %v1253 = vld [vmem:[%s1252] sm:$0xff]
        %1254 = vmatpush.msra.mxu0 0.0
        %1255 = vmatpush.msra.mxu0 0.0
        %1256 = vmatpush.msra.mxu0 0.0
        %1257 = vmatpush.msra.mxu0 0.0
        %1258 = vmatpush.msra.mxu0 0.0
        %1259 = vmatpush.msra.mxu0 0.0
        %1260 = vmatpush.msra.mxu0 0.0
        %1261 = vmatpush.msra.mxu0 0.0
        %1262 = vmatpush.msra.mxu0 0.0
        %1263 = vmatpush.msra.mxu0 0.0
        %1264 = vmatpush.msra.mxu0 0.0
        %1265 = vmatpush.msra.mxu0 0.0
        %1266 = vmatpush.msra.mxu0 0.0
        %1267 = vmatpush.msra.mxu0 0.0
        %1268 = vmatpush.msra.mxu0 0.0
        %1269 = vmatpush.msra.mxu0 %v1253
        %1270 = vmatmul.f32.gmra.mxu0 %v944
        %v1271 = vpop.f32.mrf.mxu0
        %v1272 = vadd.f32 0.0, %v1271
        %1273 = vmatmul.f32.gmra.mxu0 %v947
        %v1274 = vpop.f32.mrf.mxu0
        %v1275 = vadd.f32 0.0, %v1274
        %1276 = vdwg.mxu0
        %v1277 = vadd.f32 %v1250, %v1272
        %v1278 = vadd.f32 %v1251, %v1275
        %s1279 = scalar_lea.vmem %s3, 80
        %v1280 = vld [vmem:[%s1279] sm:$0xff]
        %1281 = vmatpush.msra.mxu0 0.0
        %1282 = vmatpush.msra.mxu0 0.0
        %1283 = vmatpush.msra.mxu0 0.0
        %1284 = vmatpush.msra.mxu0 0.0
        %1285 = vmatpush.msra.mxu0 0.0
        %1286 = vmatpush.msra.mxu0 0.0
        %1287 = vmatpush.msra.mxu0 0.0
        %1288 = vmatpush.msra.mxu0 0.0
        %1289 = vmatpush.msra.mxu0 0.0
        %1290 = vmatpush.msra.mxu0 0.0
        %1291 = vmatpush.msra.mxu0 0.0
        %1292 = vmatpush.msra.mxu0 0.0
        %1293 = vmatpush.msra.mxu0 0.0
        %1294 = vmatpush.msra.mxu0 0.0
        %1295 = vmatpush.msra.mxu0 0.0
        %1296 = vmatpush.msra.mxu0 %v1280
        %1297 = vmatmul.f32.gmra.mxu0 %v806
        %v1298 = vpop.f32.mrf.mxu0
        %v1299 = vadd.f32 0.0, %v1298
        %1300 = vmatmul.f32.gmra.mxu0 %v809
        %v1301 = vpop.f32.mrf.mxu0
        %v1302 = vadd.f32 0.0, %v1301
        %1303 = vdwg.mxu0
        %v1304 = vadd.f32 %v1277, %v1299
        %v1305 = vadd.f32 %v1278, %v1302
        %v1306 = vmax.f32 %v1304, 0.0
        %v1307 = vmax.f32 %v1305, 0.0
        %s1308 = sadd.s32 %s1063, 512
        %s1309 = scalar_lea.vmem %s224, %s1308
        %1310 = vst.msk [vmem:[%s1309] sm:$0xff] %vm225, %v1306
        %1311 = vst.msk [vmem:[%s1309 + $0x8] sm:$0xff] %vm225, %v1307
      $region52: #{decoder_block_resnet.1} parent=39 // loop_footer
        %s776 = sadd.s32 1, %s772
      $region53: #{decoder_block_resnet.1} parent=39 // loop_footer_branch
        %771 = sbr.rel target = $region49
      $region54: #{decoder_block_resnet.1} parent=39 // loop_exit
        _
      %p1312 = scmp.lt.s32.totalorder %s16, 1
      %s1313 = scalar_select %p1312, %s16, 1
      %s1314 = smul.addr %s1313, 128
      %s1315 = smul.addr %s1314, 8
      %s1316 = scalar_lea.vmem %s5, %s1315
      // Predicated region
      $region55: #{decoder_block_resnet.1} parent=39 // pred_check
        %p1317 = pneg %p144
      $region56: #{decoder_block_resnet.1} parent=39 // pred_check_branch
        %1319 = sbr.rel (%p1317) target = $region58
      $region57: #{decoder_block_resnet.1} parent=39 // pred_region
        _
      $region58: #{decoder_block_resnet.1} parent=39 // pred_fallthru
        _
    $region40: #{decoder_block_resnet.1} parent=5 // pred_fallthru
      _
    %p1320 = scmp.le.s32.totalorder 2, %s11
    // Predicated region
    $region59: #{decoder_block_resnet.1} parent=5 // pred_check
      %p1321 = pneg %p1320
    $region60: #{decoder_block_resnet.1} parent=5 // pred_check_branch
      %1323 = sbr.rel (%p1321) target = $region62
    $region61: #{decoder_block_resnet.1} parent=5 // pred_region
      %s1324 = ssub.s32 %s11, 2
      // Predicated region
      $region63: #{decoder_block_resnet.1} parent=61 // pred_check
        %p1325 = pneg %p150
      $region64: #{decoder_block_resnet.1} parent=61 // pred_check_branch
        %1327 = sbr.rel (%p1325) target = $region66
      $region65: #{decoder_block_resnet.1} parent=61 // pred_region
        %p1328 = scmp.lt.s32.totalorder %s17, 1
        %s1329 = scalar_select %p1328, %s17, 1
        %s1330 = smul.addr %s1329, 128
        %s1331 = smul.addr %s1330, 8
        %s1332 = scalar_lea.vmem %s5, %s1331
      $region66: #{decoder_block_resnet.1} parent=61 // pred_fallthru
        _
    $region62: #{decoder_block_resnet.1} parent=5 // pred_fallthru
      _
  $region6: #{decoder_block_resnet.1} parent=0 // loop_footer
    %s15 = sadd.s32 1, %s11
  $region7: #{decoder_block_resnet.1} parent=0 // loop_footer_branch
    %10 = sbr.rel target = $region3
  $region8: #{decoder_block_resnet.1} parent=0 // loop_exit
    _

</llo_original>
